<compile_context>
chip_gen: v6e
topology: v6e:2x2x1
jax: 0.10.0
libtpu: 0.0.40
codegen_flags: <defaults>
</compile_context>

<pallas_src>
import jax
import jax.numpy as jnp
from jax import lax
from jax.experimental import pallas as pl
from jax.experimental.pallas import tpu as pltpu

GN_GROUPS = 32
GN_EPS = 1e-5


# ----------------------------------------------------------------------------
# VMEM budget helpers
# ----------------------------------------------------------------------------
def _vmem_capacity_bytes():
    try:
        info = pltpu.get_tpu_info()
        for attr in ("vmem_capacity_bytes", "vmem_size_bytes", "vmem_bytes"):
            v = getattr(info, attr, None)
            if v:
                return int(v)
    except Exception:
        pass
    return 64 * 1024 * 1024            # conservative (v7x-sized) fallback


def _vmem_budget():
    cap = _vmem_capacity_bytes()
    # ~8 MiB headroom for compiler-internal scratch; never more than ~85% of
    # physical (v5e/v6e: ~108 MiB, v7x: ~54 MiB).
    return max(32 * 1024 * 1024, min(cap - (8 << 20), int(cap * 0.85)))


def _conv_vmem_bytes(ct, cin, hw, l2, out_bytes):
    in_x = 2 * cin * l2 * 2                          # double-buffered bf16 input slab
    in_w = 2 * 9 * ct * cin * 2                      # double-buffered bf16 weights
    in_small = 2 * (2 * ct * 4 + ct * ct * 4 + 2 * hw * 2)   # gamma,beta,gmat,masks
    out_b = 2 * ct * hw * out_bytes                  # double-buffered output tile
    acc = 3 * ct * hw * 4                            # f32 acc + centered/affine temps
    slabs = 3 * cin * hw * 2                         # live masked bf16 slice temps
    return in_x + in_w + in_small + out_b + acc + slabs + (6 << 20)


def _pick_cout_tile(cout, cin, hw, l2, out_bytes, budget):
    """Largest GN-group-aligned Cout tile that fits the VMEM budget."""
    cg = cout // GN_GROUPS
    cands = []
    for m in (32, 16, 8, 4, 2, 1):                   # groups per tile
        ct = m * cg
        if cout % ct:
            continue
        if ct % 8 and ct != cout:                    # keep (8,128)-friendly blocks
            continue
        cands.append(ct)
    if not cands:
        cands = [cout]
    for ct in cands:                                 # descending
        if _conv_vmem_bytes(ct, cin, hw, l2, out_bytes) <= budget:
            return ct
    return cands[-1]                                 # smallest aligned; attempt anyway


def _up_vmem_bytes(ctu, h, w, out_bytes):
    oh, ow = 2 * h, 2 * w
    in_y = 2 * ctu * h * w * 2
    mats = 2 * (oh * h * 4 + w * ow * 4)
    out_b = 2 * ctu * oh * ow * out_bytes
    zw = ctu * h * ow * 4
    tmp = ctu * oh * ow * 4
    return in_y + mats + out_b + zw + tmp + (4 << 20)


def _pick_up_tile(cout, h, w, out_bytes, budget):
    """Largest channel tile (divisor of Cout, <=64) that fits the VMEM budget."""
    divs = sorted((d for d in range(1, cout + 1) if cout % d == 0), reverse=True)
    for ctu in divs:
        if ctu > 64:                                 # bound static unroll of height matmuls
            continue
        if _up_vmem_bytes(ctu, h, w, out_bytes) <= budget:
            return ctu
    return 1


def _bilinear_matrix(in_size, out_size, dtype=jnp.float32):
    """Interpolation matrix (out_size, in_size), align_corners=True."""
    if in_size == 1:
        return jnp.ones((out_size, 1), dtype)
    i = jnp.arange(out_size, dtype=jnp.float32)
    src = i * (in_size - 1) / (out_size - 1)
    i0 = jnp.clip(jnp.floor(src).astype(jnp.int32), 0, in_size - 1)
    i1 = jnp.clip(i0 + 1, 0, in_size - 1)
    w1 = src - i0.astype(jnp.float32)
    w0 = 1.0 - w1
    m = jnp.zeros((out_size, in_size), dtype)
    rows = jnp.arange(out_size)
    m = m.at[rows, i0].add(w0.astype(dtype))
    m = m.at[rows, i1].add(w1.astype(dtype))
    return m


# ----------------------------------------------------------------------------
# forward
# ----------------------------------------------------------------------------
def conv3x3_gn_relu(x, weight, gamma, beta, *, upsample=False,
                    out_dtype=jnp.float32):
    """Conv2d(3x3, pad=1, no bias) + GroupNorm(32) + ReLU (+ bilinear x2).

    x: (N, Cin, H, W) float32 NCHW, weight: (Cout, Cin, 3, 3).
    """
    n, cin, h, w = x.shape
    cout = weight.shape[0]
    if cout % GN_GROUPS != 0:
        raise ValueError(f"GroupNorm(32, {cout}): out_channels must be a "
                         f"multiple of {GN_GROUPS}")
    hw = h * w
    cg = cout // GN_GROUPS                      # channels per GN group
    l2 = (h + 2) * w + 2                        # flat height-padded length
    budget = _vmem_budget()

    y_dtype = jnp.bfloat16 if upsample else out_dtype
    y_bytes = jnp.dtype(y_dtype).itemsize
    ct = _pick_cout_tile(cout, cin, hw, l2, y_bytes, budget)
    n_ct = cout // ct

    # --- wrapper-side packing (one cheap pass, ~(1 + 2/H) x input bytes) ----
    # pad H by 1 on each side, flatten (H+2, W) -> lanes, pad flat axis by 1.
    xp = jnp.pad(x, ((0, 0), (0, 0), (1, 1), (0, 0))).reshape(n, cin, (h + 2) * w)
    x2 = jnp.pad(xp, ((0, 0), (0, 0), (1, 1))).astype(jnp.bfloat16)   # (N,Cin,L2)

    # weights: (Cout,Cin,3,3) -> (9, Cout, Cin), tap index t = dh*3 + dw.
    w9 = jnp.transpose(weight, (2, 3, 0, 1)).reshape(9, cout, cin)
    w9 = w9.astype(jnp.bfloat16)
    gamma2 = gamma.reshape(cout, 1).astype(jnp.float32)
    beta2 = beta.reshape(cout, 1).astype(jnp.float32)
    # block-diagonal group-sum matrix (Cout tiles always align with GN groups).
    gmat = jnp.kron(jnp.eye(ct // cg, dtype=jnp.float32),
                    jnp.ones((cg, cg), jnp.float32))                  # (ct, ct)
    # width-border masks for the dw=0 / dw=2 taps, applied to the bf16 RHS.
    j_idx = jnp.arange(hw, dtype=jnp.int32) % w
    masks = jnp.stack([(j_idx > 0), (j_idx < w - 1)]).astype(jnp.bfloat16)  # (2,HW)

    inv_cnt = 1.0 / float(cg * hw)

    # ------------------------------------------------------------------
    # Kernel 1: conv3x3 (9 chained accumulating matmuls) + GroupNorm + ReLU
    # per (sample, Cout-tile) grid step.
    # ------------------------------------------------------------------
    def conv_kernel(x_ref, w_ref, gamma_ref, beta_ref, gmat_ref, mask_ref, out_ref):
        # x_ref : (1, Cin, L2) bf16 ; w_ref : (9, ct, Cin) bf16
        # gamma/beta : (ct, 1) f32 ; gmat : (ct, ct) f32 ; mask : (2, HW) bf16
        ml = mask_ref[0:1, :]                                      # j > 0
        mr = mask_ref[1:2, :]                                      # j < W-1

        acc = None
        for dh in range(3):
            base = dh * w
            taps = (
                (1, x_ref[0, :, base + 1:base + 1 + hw]),          # centre, never clipped
                (0, x_ref[0, :, base:base + hw] * ml),             # left, j==0 zeroed
                (2, x_ref[0, :, base + 2:base + 2 + hw] * mr),     # right, j==W-1 zeroed
            )
            for dw, rhs in taps:
                p = jnp.dot(w_ref[dh * 3 + dw], rhs,
                            preferred_element_type=jnp.float32)    # (ct, HW) f32
                acc = p if acc is None else acc + p                # MXU-chained accumulate

        # GroupNorm(32): two-pass (mean, then centered variance), all f32.
        s1 = jnp.sum(acc, axis=-1, keepdims=True)                  # (ct, 1)
        mean = jnp.dot(gmat_ref[...], s1,
                       preferred_element_type=jnp.float32) * inv_cnt
        d = acc - mean
        s2 = jnp.sum(d * d, axis=-1, keepdims=True)
        var = jnp.dot(gmat_ref[...], s2,
                      preferred_element_type=jnp.float32) * inv_cnt
        yn = d * lax.rsqrt(var + GN_EPS)
        yn = yn * gamma_ref[...] + beta_ref[...]
        out_ref[0] = jnp.maximum(yn, 0.0).astype(out_ref.dtype)

    conv_cost = pl.CostEstimate(
        flops=int(2 * 9 * cin * cout * hw * n + 10 * cout * hw * n),
        transcendentals=int(n * cout),
        bytes_accessed=int(n * cin * l2 * 2 + 9 * cout * cin * 2
                           + n * cout * hw * y_bytes),
    )

    y = pl.pallas_call(
        conv_kernel,
        out_shape=jax.ShapeDtypeStruct((n, cout, hw), y_dtype),
        grid=(n, n_ct),
        in_specs=[
            pl.BlockSpec((1, cin, l2), lambda i, j: (i, 0, 0)),
            pl.BlockSpec((9, ct, cin), lambda i, j: (0, j, 0)),
            pl.BlockSpec((ct, 1), lambda i, j: (j, 0)),
            pl.BlockSpec((ct, 1), lambda i, j: (j, 0)),
            pl.BlockSpec((ct, ct), lambda i, j: (0, 0)),
            pl.BlockSpec((2, hw), lambda i, j: (0, 0)),
        ],
        out_specs=pl.BlockSpec((1, ct, hw), lambda i, j: (i, j, 0)),
        compiler_params=pltpu.CompilerParams(
            dimension_semantics=("parallel", "parallel"),
            vmem_limit_bytes=budget),
        cost_estimate=conv_cost,
    )(x2, w9, gamma2, beta2, gmat, masks)

    if not upsample:
        return y.reshape(n, cout, h, w)

    # ------------------------------------------------------------------
    # Kernel 2: bilinear x2 upsample (align_corners=True), channel-blocked.
    # One wide width matmul over the channel slab + per-channel height
    # matmuls (all in f32; y intermediate is bf16 to halve its HBM traffic).
    # ------------------------------------------------------------------
    oh, ow = 2 * h, 2 * w
    out_bytes = jnp.dtype(out_dtype).itemsize
    lmat = _bilinear_matrix(h, oh)                                 # (2H, H)  f32
    rtmat = _bilinear_matrix(w, ow).T                              # (W, 2W)  f32
    ctu = _pick_up_tile(cout, h, w, out_bytes, budget)
    n_ctu = cout // ctu
    y2 = y.reshape(n, cout * h, w)                                 # free reshape

    def up_kernel(y_ref, l_ref, rt_ref, out_ref):
        # y_ref : (1, ctu*H, W) bf16 ; l : (2H, H) f32 ; rt : (W, 2W) f32
        # out   : (1, ctu*2H, 2W)
        zw = jnp.dot(y_ref[0].astype(jnp.float32), rt_ref[...],
                     preferred_element_type=jnp.float32)           # (ctu*H, 2W) f32
        lm = l_ref[...]
        for c in range(ctu):                                       # static unroll (<=64)
            out_ref[0, c * oh:(c + 1) * oh, :] = jnp.dot(
                lm, zw[c * h:(c + 1) * h, :],
                preferred_element_type=jnp.float32).astype(out_ref.dtype)

    up_cost = pl.CostEstimate(
        flops=int(2 * n * cout * (h * w * ow + oh * h * ow)),
        transcendentals=0,
        bytes_accessed=int(n * cout * hw * 2 + n * cout * oh * ow * out_bytes),
    )

    out = pl.pallas_call(
        up_kernel,
        out_shape=jax.ShapeDtypeStruct((n, cout * oh, ow), out_dtype),
        grid=(n, n_ctu),
        in_specs=[
            pl.BlockSpec((1, ctu * h, w), lambda i, j: (i, j, 0)),
            pl.BlockSpec((oh, h), lambda i, j: (0, 0)),
            pl.BlockSpec((w, ow), lambda i, j: (0, 0)),
        ],
        out_specs=pl.BlockSpec((1, ctu * oh, ow), lambda i, j: (i, j, 0)),
        compiler_params=pltpu.CompilerParams(
            dimension_semantics=("parallel", "parallel"),
            vmem_limit_bytes=budget),
        cost_estimate=up_cost,
    )(y2, lmat, rtmat)
    return out.reshape(n, cout, oh, ow)


# ----------------------------------------------------------------------------
# Pure-JAX reference (sanity check only).
# ----------------------------------------------------------------------------
def _reference(x, weight, gamma, beta, *, upsample=False):
    y = lax.conv_general_dilated(
        x, weight, window_strides=(1, 1), padding="SAME",
        dimension_numbers=("NCHW", "OIHW", "NCHW"))
    n, c, h, w = y.shape
    cg = c // GN_GROUPS
    yg = y.reshape(n, GN_GROUPS, cg * h * w)
    mean = yg.mean(-1, keepdims=True)
    var = yg.var(-1, keepdims=True)
    yn = ((yg - mean) / jnp.sqrt(var + GN_EPS)).reshape(n, c, h, w)
    y = jnp.maximum(yn * gamma.reshape(1, c, 1, 1) + beta.reshape(1, c, 1, 1), 0)
    if upsample:
        lm = _bilinear_matrix(h, 2 * h)
        rm = _bilinear_matrix(w, 2 * w)
        y = jnp.einsum("oh,nchw,pw->ncop", lm, y, rm)
    return y


if __name__ == "__main__":
    N, CIN, COUT, H, W = 2, 4, 32, 16, 16   # GroupNorm(32, COUT) => COUT % 32 == 0

    key = jax.random.PRNGKey(0)
    kx, kw, kg, kb = jax.random.split(key, 4)
    x = jax.random.normal(kx, (N, CIN, H, W), jnp.float32)
    weight = jax.random.normal(kw, (COUT, CIN, 3, 3), jnp.float32) * 0.1
    gamma = 1.0 + 0.1 * jax.random.normal(kg, (COUT,), jnp.float32)
    beta = 0.1 * jax.random.normal(kb, (COUT,), jnp.float32)

    # The kernel feeds the MXU in bf16; compare against an f32 reference
    # evaluated on the bf16-rounded inputs.
    x_q = x.astype(jnp.bfloat16).astype(jnp.float32)
    w_q = weight.astype(jnp.bfloat16).astype(jnp.float32)

    for up in (False, True):
        out = jax.block_until_ready(
            conv3x3_gn_relu(x_q, w_q, gamma, beta, upsample=up))
        ref = _reference(x_q, w_q, gamma, beta, upsample=up)
        assert out.shape == ref.shape, (out.shape, ref.shape)
        err = float(jnp.max(jnp.abs(out - ref)))
        assert jnp.allclose(out, ref, atol=3e-2, rtol=3e-2), (
            f"mismatch (upsample={up}): max abs err {err}")

    print("KERNEL_OK")
</pallas_src>

<mosaic_0001>
module attributes {stable_mosaic.version = 11 : i64} {
  func.func @conv_kernel(%arg0: i32, %arg1: i32, %arg2: memref<1x4x290xbf16, #tpu.memory_space<vmem>>, %arg3: memref<9x32x4xbf16, #tpu.memory_space<vmem>>, %arg4: memref<32x1xf32, #tpu.memory_space<vmem>>, %arg5: memref<32x1xf32, #tpu.memory_space<vmem>>, %arg6: memref<32x32xf32, #tpu.memory_space<vmem>>, %arg7: memref<2x256xbf16, #tpu.memory_space<vmem>>, %arg8: memref<1x32x256xf32, #tpu.memory_space<vmem>>) attributes {dimension_semantics = [#tpu.dimension_semantics<parallel>, #tpu.dimension_semantics<parallel>], iteration_bounds = array<i64: 2, 1>, scalar_prefetch = 0 : i64, scratch_operands = 0 : i64, tpu.core_type = #tpu.core_type<tc>, window_params = [{transform_indices = @transform_0, window_bounds = array<i64: 1, 4, 290>}, {transform_indices = @transform_1, window_bounds = array<i64: 9, 32, 4>}, {transform_indices = @transform_2, window_bounds = array<i64: 32, 1>}, {transform_indices = @transform_3, window_bounds = array<i64: 32, 1>}, {pipeline_mode = #tpu.pipeline_mode<synchronous>, transform_indices = @transform_4, window_bounds = array<i64: 32, 32>}, {pipeline_mode = #tpu.pipeline_mode<synchronous>, transform_indices = @transform_5, window_bounds = array<i64: 2, 256>}, {transform_indices = @transform_6, window_bounds = array<i64: 1, 32, 256>}]} {
    %c0 = arith.constant 0 : index
    %c0_0 = arith.constant 0 : index
    %0 = vector.load %arg7[%c0, %c0_0] : memref<2x256xbf16, #tpu.memory_space<vmem>>, vector<1x256xbf16>
    %c1 = arith.constant 1 : index
    %c0_1 = arith.constant 0 : index
    %1 = vector.load %arg7[%c1, %c0_1] : memref<2x256xbf16, #tpu.memory_space<vmem>>, vector<1x256xbf16>
    %c0_2 = arith.constant 0 : index
    %c0_3 = arith.constant 0 : index
    %c1_4 = arith.constant 1 : index
    %2 = vector.load %arg2[%c0_2, %c0_3, %c1_4] : memref<1x4x290xbf16, #tpu.memory_space<vmem>>, vector<1x4x256xbf16>
    %3 = vector.shape_cast %2 : vector<1x4x256xbf16> to vector<4x256xbf16>
    %c0_5 = arith.constant 0 : index
    %c0_6 = arith.constant 0 : index
    %c0_7 = arith.constant 0 : index
    %4 = vector.load %arg2[%c0_5, %c0_6, %c0_7] : memref<1x4x290xbf16, #tpu.memory_space<vmem>>, vector<1x4x256xbf16>
    %5 = vector.shape_cast %4 : vector<1x4x256xbf16> to vector<4x256xbf16>
    %6 = vector.broadcast %0 : vector<1x256xbf16> to vector<4x256xbf16>
    %7 = arith.mulf %5, %6 : vector<4x256xbf16>
    %c0_8 = arith.constant 0 : index
    %c0_9 = arith.constant 0 : index
    %c2 = arith.constant 2 : index
    %8 = vector.load %arg2[%c0_8, %c0_9, %c2] : memref<1x4x290xbf16, #tpu.memory_space<vmem>>, vector<1x4x256xbf16>
    %9 = vector.shape_cast %8 : vector<1x4x256xbf16> to vector<4x256xbf16>
    %10 = vector.broadcast %1 : vector<1x256xbf16> to vector<4x256xbf16>
    %11 = arith.mulf %9, %10 : vector<4x256xbf16>
    %c1_10 = arith.constant 1 : index
    %c0_11 = arith.constant 0 : index
    %c0_12 = arith.constant 0 : index
    %12 = vector.load %arg3[%c1_10, %c0_11, %c0_12] : memref<9x32x4xbf16, #tpu.memory_space<vmem>>, vector<1x32x4xbf16>
    %13 = vector.shape_cast %12 : vector<1x32x4xbf16> to vector<32x4xbf16>
    %cst = arith.constant dense<0.000000e+00> : vector<32x256xf32>
    %14 = tpu.matmul %13, %3, %cst {dimension_numbers = #tpu.dot_dimension_numbers<[1], [0], [0], [1], [0, 0, 1, 1], [], []>} : vector<32x4xbf16>, vector<4x256xbf16>, vector<32x256xf32> -> vector<32x256xf32>
    %c0_13 = arith.constant 0 : index
    %c0_14 = arith.constant 0 : index
    %c0_15 = arith.constant 0 : index
    %15 = vector.load %arg3[%c0_13, %c0_14, %c0_15] : memref<9x32x4xbf16, #tpu.memory_space<vmem>>, vector<1x32x4xbf16>
    %16 = vector.shape_cast %15 : vector<1x32x4xbf16> to vector<32x4xbf16>
    %cst_16 = arith.constant dense<0.000000e+00> : vector<32x256xf32>
    %17 = tpu.matmul %16, %7, %cst_16 {dimension_numbers = #tpu.dot_dimension_numbers<[1], [0], [0], [1], [0, 0, 1, 1], [], []>} : vector<32x4xbf16>, vector<4x256xbf16>, vector<32x256xf32> -> vector<32x256xf32>
    %18 = arith.addf %14, %17 : vector<32x256xf32>
    %c2_17 = arith.constant 2 : index
    %c0_18 = arith.constant 0 : index
    %c0_19 = arith.constant 0 : index
    %19 = vector.load %arg3[%c2_17, %c0_18, %c0_19] : memref<9x32x4xbf16, #tpu.memory_space<vmem>>, vector<1x32x4xbf16>
    %20 = vector.shape_cast %19 : vector<1x32x4xbf16> to vector<32x4xbf16>
    %cst_20 = arith.constant dense<0.000000e+00> : vector<32x256xf32>
    %21 = tpu.matmul %20, %11, %cst_20 {dimension_numbers = #tpu.dot_dimension_numbers<[1], [0], [0], [1], [0, 0, 1, 1], [], []>} : vector<32x4xbf16>, vector<4x256xbf16>, vector<32x256xf32> -> vector<32x256xf32>
    %22 = arith.addf %18, %21 : vector<32x256xf32>
    %c0_21 = arith.constant 0 : index
    %c0_22 = arith.constant 0 : index
    %c17 = arith.constant 17 : index
    %23 = vector.load %arg2[%c0_21, %c0_22, %c17] : memref<1x4x290xbf16, #tpu.memory_space<vmem>>, vector<1x4x256xbf16>
    %24 = vector.shape_cast %23 : vector<1x4x256xbf16> to vector<4x256xbf16>
    %c0_23 = arith.constant 0 : index
    %c0_24 = arith.constant 0 : index
    %c16 = arith.constant 16 : index
    %25 = vector.load %arg2[%c0_23, %c0_24, %c16] : memref<1x4x290xbf16, #tpu.memory_space<vmem>>, vector<1x4x256xbf16>
    %26 = vector.shape_cast %25 : vector<1x4x256xbf16> to vector<4x256xbf16>
    %27 = vector.broadcast %0 : vector<1x256xbf16> to vector<4x256xbf16>
    %28 = arith.mulf %26, %27 : vector<4x256xbf16>
    %c0_25 = arith.constant 0 : index
    %c0_26 = arith.constant 0 : index
    %c18 = arith.constant 18 : index
    %29 = vector.load %arg2[%c0_25, %c0_26, %c18] : memref<1x4x290xbf16, #tpu.memory_space<vmem>>, vector<1x4x256xbf16>
    %30 = vector.shape_cast %29 : vector<1x4x256xbf16> to vector<4x256xbf16>
    %31 = vector.broadcast %1 : vector<1x256xbf16> to vector<4x256xbf16>
    %32 = arith.mulf %30, %31 : vector<4x256xbf16>
    %c4 = arith.constant 4 : index
    %c0_27 = arith.constant 0 : index
    %c0_28 = arith.constant 0 : index
    %33 = vector.load %arg3[%c4, %c0_27, %c0_28] : memref<9x32x4xbf16, #tpu.memory_space<vmem>>, vector<1x32x4xbf16>
    %34 = vector.shape_cast %33 : vector<1x32x4xbf16> to vector<32x4xbf16>
    %cst_29 = arith.constant dense<0.000000e+00> : vector<32x256xf32>
    %35 = tpu.matmul %34, %24, %cst_29 {dimension_numbers = #tpu.dot_dimension_numbers<[1], [0], [0], [1], [0, 0, 1, 1], [], []>} : vector<32x4xbf16>, vector<4x256xbf16>, vector<32x256xf32> -> vector<32x256xf32>
    %36 = arith.addf %22, %35 : vector<32x256xf32>
    %c3 = arith.constant 3 : index
    %c0_30 = arith.constant 0 : index
    %c0_31 = arith.constant 0 : index
    %37 = vector.load %arg3[%c3, %c0_30, %c0_31] : memref<9x32x4xbf16, #tpu.memory_space<vmem>>, vector<1x32x4xbf16>
    %38 = vector.shape_cast %37 : vector<1x32x4xbf16> to vector<32x4xbf16>
    %cst_32 = arith.constant dense<0.000000e+00> : vector<32x256xf32>
    %39 = tpu.matmul %38, %28, %cst_32 {dimension_numbers = #tpu.dot_dimension_numbers<[1], [0], [0], [1], [0, 0, 1, 1], [], []>} : vector<32x4xbf16>, vector<4x256xbf16>, vector<32x256xf32> -> vector<32x256xf32>
    %40 = arith.addf %36, %39 : vector<32x256xf32>
    %c5 = arith.constant 5 : index
    %c0_33 = arith.constant 0 : index
    %c0_34 = arith.constant 0 : index
    %41 = vector.load %arg3[%c5, %c0_33, %c0_34] : memref<9x32x4xbf16, #tpu.memory_space<vmem>>, vector<1x32x4xbf16>
    %42 = vector.shape_cast %41 : vector<1x32x4xbf16> to vector<32x4xbf16>
    %cst_35 = arith.constant dense<0.000000e+00> : vector<32x256xf32>
    %43 = tpu.matmul %42, %32, %cst_35 {dimension_numbers = #tpu.dot_dimension_numbers<[1], [0], [0], [1], [0, 0, 1, 1], [], []>} : vector<32x4xbf16>, vector<4x256xbf16>, vector<32x256xf32> -> vector<32x256xf32>
    %44 = arith.addf %40, %43 : vector<32x256xf32>
    %c0_36 = arith.constant 0 : index
    %c0_37 = arith.constant 0 : index
    %c33 = arith.constant 33 : index
    %45 = vector.load %arg2[%c0_36, %c0_37, %c33] : memref<1x4x290xbf16, #tpu.memory_space<vmem>>, vector<1x4x256xbf16>
    %46 = vector.shape_cast %45 : vector<1x4x256xbf16> to vector<4x256xbf16>
    %c0_38 = arith.constant 0 : index
    %c0_39 = arith.constant 0 : index
    %c32 = arith.constant 32 : index
    %47 = vector.load %arg2[%c0_38, %c0_39, %c32] : memref<1x4x290xbf16, #tpu.memory_space<vmem>>, vector<1x4x256xbf16>
    %48 = vector.shape_cast %47 : vector<1x4x256xbf16> to vector<4x256xbf16>
    %49 = vector.broadcast %0 : vector<1x256xbf16> to vector<4x256xbf16>
    %50 = arith.mulf %48, %49 : vector<4x256xbf16>
    %c0_40 = arith.constant 0 : index
    %c0_41 = arith.constant 0 : index
    %c34 = arith.constant 34 : index
    %51 = vector.load %arg2[%c0_40, %c0_41, %c34] : memref<1x4x290xbf16, #tpu.memory_space<vmem>>, vector<1x4x256xbf16>
    %52 = vector.shape_cast %51 : vector<1x4x256xbf16> to vector<4x256xbf16>
    %53 = vector.broadcast %1 : vector<1x256xbf16> to vector<4x256xbf16>
    %54 = arith.mulf %52, %53 : vector<4x256xbf16>
    %c7 = arith.constant 7 : index
    %c0_42 = arith.constant 0 : index
    %c0_43 = arith.constant 0 : index
    %55 = vector.load %arg3[%c7, %c0_42, %c0_43] : memref<9x32x4xbf16, #tpu.memory_space<vmem>>, vector<1x32x4xbf16>
    %56 = vector.shape_cast %55 : vector<1x32x4xbf16> to vector<32x4xbf16>
    %cst_44 = arith.constant dense<0.000000e+00> : vector<32x256xf32>
    %57 = tpu.matmul %56, %46, %cst_44 {dimension_numbers = #tpu.dot_dimension_numbers<[1], [0], [0], [1], [0, 0, 1, 1], [], []>} : vector<32x4xbf16>, vector<4x256xbf16>, vector<32x256xf32> -> vector<32x256xf32>
    %58 = arith.addf %44, %57 : vector<32x256xf32>
    %c6 = arith.constant 6 : index
    %c0_45 = arith.constant 0 : index
    %c0_46 = arith.constant 0 : index
    %59 = vector.load %arg3[%c6, %c0_45, %c0_46] : memref<9x32x4xbf16, #tpu.memory_space<vmem>>, vector<1x32x4xbf16>
    %60 = vector.shape_cast %59 : vector<1x32x4xbf16> to vector<32x4xbf16>
    %cst_47 = arith.constant dense<0.000000e+00> : vector<32x256xf32>
    %61 = tpu.matmul %60, %50, %cst_47 {dimension_numbers = #tpu.dot_dimension_numbers<[1], [0], [0], [1], [0, 0, 1, 1], [], []>} : vector<32x4xbf16>, vector<4x256xbf16>, vector<32x256xf32> -> vector<32x256xf32>
    %62 = arith.addf %58, %61 : vector<32x256xf32>
    %c8 = arith.constant 8 : index
    %c0_48 = arith.constant 0 : index
    %c0_49 = arith.constant 0 : index
    %63 = vector.load %arg3[%c8, %c0_48, %c0_49] : memref<9x32x4xbf16, #tpu.memory_space<vmem>>, vector<1x32x4xbf16>
    %64 = vector.shape_cast %63 : vector<1x32x4xbf16> to vector<32x4xbf16>
    %cst_50 = arith.constant dense<0.000000e+00> : vector<32x256xf32>
    %65 = tpu.matmul %64, %54, %cst_50 {dimension_numbers = #tpu.dot_dimension_numbers<[1], [0], [0], [1], [0, 0, 1, 1], [], []>} : vector<32x4xbf16>, vector<4x256xbf16>, vector<32x256xf32> -> vector<32x256xf32>
    %66 = arith.addf %62, %65 : vector<32x256xf32>
    %cst_51 = arith.constant dense<0.000000e+00> : vector<32xf32>
    %67 = vector.multi_reduction <add>, %66, %cst_51 [1] : vector<32x256xf32> to vector<32xf32>
    %68 = vector.shape_cast %67 : vector<32xf32> to vector<32x1xf32>
    %c0_52 = arith.constant 0 : index
    %c0_53 = arith.constant 0 : index
    %69 = vector.load %arg6[%c0_52, %c0_53] : memref<32x32xf32, #tpu.memory_space<vmem>>, vector<32x32xf32>
    %cst_54 = arith.constant dense<0.000000e+00> : vector<32x1xf32>
    %70 = tpu.matmul %69, %68, %cst_54 {dimension_numbers = #tpu.dot_dimension_numbers<[1], [0], [0], [1], [0, 0, 1, 1], [], []>} : vector<32x32xf32>, vector<32x1xf32>, vector<32x1xf32> -> vector<32x1xf32>
    %cst_55 = arith.constant 3.906250e-03 : f32
    %71 = vector.broadcast %cst_55 : f32 to vector<32x1xf32>
    %72 = arith.mulf %70, %71 : vector<32x1xf32>
    %73 = vector.broadcast %72 : vector<32x1xf32> to vector<32x256xf32>
    %74 = arith.subf %66, %73 : vector<32x256xf32>
    %75 = arith.mulf %74, %74 : vector<32x256xf32>
    %cst_56 = arith.constant dense<0.000000e+00> : vector<32xf32>
    %76 = vector.multi_reduction <add>, %75, %cst_56 [1] : vector<32x256xf32> to vector<32xf32>
    %77 = vector.shape_cast %76 : vector<32xf32> to vector<32x1xf32>
    %c0_57 = arith.constant 0 : index
    %c0_58 = arith.constant 0 : index
    %78 = vector.load %arg6[%c0_57, %c0_58] : memref<32x32xf32, #tpu.memory_space<vmem>>, vector<32x32xf32>
    %cst_59 = arith.constant dense<0.000000e+00> : vector<32x1xf32>
    %79 = tpu.matmul %78, %77, %cst_59 {dimension_numbers = #tpu.dot_dimension_numbers<[1], [0], [0], [1], [0, 0, 1, 1], [], []>} : vector<32x32xf32>, vector<32x1xf32>, vector<32x1xf32> -> vector<32x1xf32>
    %cst_60 = arith.constant 3.906250e-03 : f32
    %80 = vector.broadcast %cst_60 : f32 to vector<32x1xf32>
    %81 = arith.mulf %79, %80 : vector<32x1xf32>
    %cst_61 = arith.constant 9.99999974E-6 : f32
    %82 = vector.broadcast %cst_61 : f32 to vector<32x1xf32>
    %83 = arith.addf %81, %82 : vector<32x1xf32>
    %84 = math.rsqrt %83 : vector<32x1xf32>
    %85 = vector.broadcast %84 : vector<32x1xf32> to vector<32x256xf32>
    %86 = arith.mulf %74, %85 : vector<32x256xf32>
    %c0_62 = arith.constant 0 : index
    %c0_63 = arith.constant 0 : index
    %87 = vector.load %arg4[%c0_62, %c0_63] : memref<32x1xf32, #tpu.memory_space<vmem>>, vector<32x1xf32>
    %88 = vector.broadcast %87 : vector<32x1xf32> to vector<32x256xf32>
    %89 = arith.mulf %86, %88 : vector<32x256xf32>
    %c0_64 = arith.constant 0 : index
    %c0_65 = arith.constant 0 : index
    %90 = vector.load %arg5[%c0_64, %c0_65] : memref<32x1xf32, #tpu.memory_space<vmem>>, vector<32x1xf32>
    %91 = vector.broadcast %90 : vector<32x1xf32> to vector<32x256xf32>
    %92 = arith.addf %89, %91 : vector<32x256xf32>
    %cst_66 = arith.constant 0.000000e+00 : f32
    %93 = vector.broadcast %cst_66 : f32 to vector<32x256xf32>
    %94 = arith.maximumf %92, %93 : vector<32x256xf32>
    %c0_67 = arith.constant 0 : index
    %c0_68 = arith.constant 0 : index
    %c0_69 = arith.constant 0 : index
    %95 = vector.load %arg8[%c0_67, %c0_68, %c0_69] : memref<1x32x256xf32, #tpu.memory_space<vmem>>, vector<1x32x256xf32>
    %96 = vector.shape_cast %95 : vector<1x32x256xf32> to vector<32x256xf32>
    %97 = vector.shape_cast %94 : vector<32x256xf32> to vector<1x32x256xf32>
    tpu.vector_store %arg8[%c0_67, %c0_68, %c0_69], %97 {strides = array<i32>} : memref<1x32x256xf32, #tpu.memory_space<vmem>>, vector<1x32x256xf32>,
    return
  }
  func.func @transform_0(%arg0: i32, %arg1: i32) -> (i32, i32, i32) {
    %c0_i32 = arith.constant 0 : i32
    %c0_i32_0 = arith.constant 0 : i32
    %c0_i32_1 = arith.constant 0 : i32
    return %arg0, %c0_i32, %c0_i32_0 : i32, i32, i32
  }
  func.func @transform_1(%arg0: i32, %arg1: i32) -> (i32, i32, i32) {
    %c0_i32 = arith.constant 0 : i32
    %c0_i32_0 = arith.constant 0 : i32
    %c0_i32_1 = arith.constant 0 : i32
    return %c0_i32, %arg1, %c0_i32_0 : i32, i32, i32
  }
  func.func @transform_2(%arg0: i32, %arg1: i32) -> (i32, i32) {
    %c0_i32 = arith.constant 0 : i32
    %c0_i32_0 = arith.constant 0 : i32
    return %arg1, %c0_i32 : i32, i32
  }
  func.func @transform_3(%arg0: i32, %arg1: i32) -> (i32, i32) {
    %c0_i32 = arith.constant 0 : i32
    %c0_i32_0 = arith.constant 0 : i32
    return %arg1, %c0_i32 : i32, i32
  }
  func.func @transform_4(%arg0: i32, %arg1: i32) -> (i32, i32) {
    %c0_i32 = arith.constant 0 : i32
    %c0_i32_0 = arith.constant 0 : i32
    %c0_i32_1 = arith.constant 0 : i32
    return %c0_i32, %c0_i32_0 : i32, i32
  }
  func.func @transform_5(%arg0: i32, %arg1: i32) -> (i32, i32) {
    %c0_i32 = arith.constant 0 : i32
    %c0_i32_0 = arith.constant 0 : i32
    %c0_i32_1 = arith.constant 0 : i32
    return %c0_i32, %c0_i32_0 : i32, i32
  }
  func.func @transform_6(%arg0: i32, %arg1: i32) -> (i32, i32, i32) {
    %c0_i32 = arith.constant 0 : i32
    %c0_i32_0 = arith.constant 0 : i32
    return %arg0, %arg1, %c0_i32 : i32, i32, i32
  }
}

</mosaic_0001>

<llo_original>
// kernel: tpu_custom_call.1
$region0: #{tpu_custom_call.1}
  #allocation0 [shape = 'u32[]', space=smem, size = 0x4, offset = 0x4, fixed_abs, tag = 'smem constant byte address 0x4 - core index']
  #allocation1 [shape = 'u32[144,128]{1,0:T(1,128)}', space=vmem, size = 0x12000, scoped, tag = 'internal scratch']
  %s0 = inlined_call_operand.vmem [shape: bf16[2,4,290], index: 0, kind: input, shape index: {}]
  %s1 = inlined_call_operand.vmem [shape: bf16[9,32,4], index: 1, kind: input, shape index: {}]
  %s2 = inlined_call_operand.vmem [shape: f32[32,1], index: 2, kind: input, shape index: {}]
  %s3 = inlined_call_operand.vmem [shape: f32[32,1], index: 3, kind: input, shape index: {}]
  %s4 = inlined_call_operand.vmem [shape: f32[32,32], index: 4, kind: input, shape index: {}]
  %s5 = inlined_call_operand.vmem [shape: bf16[2,256], index: 5, kind: input, shape index: {}]
  %s6 = inlined_call_operand.hbm [shape: f32[2,32,256], index: 6, kind: output, shape index: {}]
  %s7 = sld [smem:[#allocation0]]
  $region57: #{tpu_custom_call.1} parent=0
    _
  %s9 = ssub.s32 1, %s7
  %s10 = scalar_select 0, %s9, %s7
  $region1: #{tpu_custom_call.1} parent=0
    #allocation2 [shape = 'u8[65536]{0}', space=vmem, size = 0x10000, scoped, tag = 'output window, operand 0']
    #allocation3 [shape = 's32[2]{0}', space=sflag, size = 0x8, scoped, tag = 'scoped memory for tpu_custom_call.1']
    %11 = vsyncpa [#allocation3], 0
    %s12 = scalar_lea.sflag [#allocation3], 1
    %13 = vsyncpa %s12, 0
    loop: start=0, step=1, limit=4
    $region2: #{tpu_custom_call.1} parent=1 // loop_pre_header
      _
    $region3: #{tpu_custom_call.1} parent=1 // loop_header
      %s15 = sphi 0, %s19
      %p16 = scmp.ge.s32.totalorder %s15, 4
      %s22 = sphi 0, %s34
      %s23 = sphi 0, %s30
      %s24 = sphi 0, %s22
      %s25 = sphi 0, %s23
      %s26 = sphi 0, %s24
      %s27 = sphi 0, %s25
      %s37 = sphi 0, %s39
      %s40 = sphi 0, %s37
      %s41 = sphi 0, %s40
      %s57 = sphi 0, %s41
      %s63 = sphi 0, %s65
      %s66 = sphi 0, %s63
      %s67 = sphi 0, %s66
      %s83 = sphi 0, %s67
      %s89 = sphi 0, %s91
      %s92 = sphi 0, %s89
      %s93 = sphi 0, %s92
      %s109 = sphi 0, %s93
      %s115 = sphi 0, %s117
      %s118 = sphi 0, %s115
      %s119 = sphi 0, %s118
      %s135 = sphi 0, %s119
      %s139 = sphi 0, %s139
      %s141 = sphi 0, %s139
      %s142 = sphi 0, %s141
      %s156 = sphi 0, %s142
      %s160 = sphi 0, %s160
      %s162 = sphi 0, %s160
      %s163 = sphi 0, %s162
      %s177 = sphi 0, %s163
      %s185 = sphi 0, %s187
      %s188 = sphi 0, %s185
      %s189 = sphi 0, %s188
      %s205 = sphi 0, %s189
    $region4: #{tpu_custom_call.1} parent=1 // loop_header_branch
      %18 = sbr.rel (%p16) target = $region8
    $region5: #{tpu_custom_call.1} parent=1 // loop_body
      %s20 = ssub.s32 %s15, 1
      %s21 = ssub.s32 %s15, 2
      %s28 = sadd.s32 1, %s23
      %p29 = scmp.ge.s32.totalorder %s28, 1
      %s30 = scalar_select %p29, 0, %s28
      %s31 = sadd.s32 1, %s22
      %s32 = scalar_select %p29, %s31, %s22
      %p33 = scmp.ge.s32.totalorder %s32, 2
      %s34 = scalar_select %p33, 0, %s32
      %s35 = ssub.s32 %s22, %s34
      %p36 = scmp.eq.s32.totalorder %s35, 0
      %s38 = sadd.s32 %s37, 1
      %s39 = scalar_select %p36, %s37, %s38
      %p42 = pneg %p36
      %p43 = scmp.eq.s32.totalorder %s15, 1
      %p44 = por %p42, %p43
      %p45 = scmp.ne.s32.totalorder %s37, %s40
      %p46 = scmp.eq.s32.totalorder %s15, 0
      %p47 = por %p45, %p46
      %p48 = scmp.ne.s32.totalorder %s37, %s40
      %p49 = scmp.eq.s32.totalorder %s20, 1
      %p50 = por %p48, %p49
      %p51 = scmp.ne.s32.totalorder %s40, %s41
      %p52 = scmp.eq.s32.totalorder %s20, 0
      %p53 = por %p51, %p52
      %p54 = scmp.ne.s32.totalorder %s40, %s41
      %p55 = scmp.eq.s32.totalorder %s21, 1
      %p56 = por %p54, %p55
      %p58 = scmp.ne.s32.totalorder %s41, %s57
      %p59 = scmp.eq.s32.totalorder %s21, 0
      %p60 = por %p58, %p59
      %s61 = ssub.s32 %s23, %s30
      %p62 = scmp.eq.s32.totalorder %s61, 0
      %s64 = sadd.s32 %s63, 1
      %s65 = scalar_select %p62, %s63, %s64
      %p68 = pneg %p62
      %p69 = scmp.eq.s32.totalorder %s15, 1
      %p70 = por %p68, %p69
      %p71 = scmp.ne.s32.totalorder %s63, %s66
      %p72 = scmp.eq.s32.totalorder %s15, 0
      %p73 = por %p71, %p72
      %p74 = scmp.ne.s32.totalorder %s63, %s66
      %p75 = scmp.eq.s32.totalorder %s20, 1
      %p76 = por %p74, %p75
      %p77 = scmp.ne.s32.totalorder %s66, %s67
      %p78 = scmp.eq.s32.totalorder %s20, 0
      %p79 = por %p77, %p78
      %p80 = scmp.ne.s32.totalorder %s66, %s67
      %p81 = scmp.eq.s32.totalorder %s21, 1
      %p82 = por %p80, %p81
      %p84 = scmp.ne.s32.totalorder %s67, %s83
      %p85 = scmp.eq.s32.totalorder %s21, 0
      %p86 = por %p84, %p85
      %s87 = ssub.s32 %s23, %s30
      %p88 = scmp.eq.s32.totalorder %s87, 0
      %s90 = sadd.s32 %s89, 1
      %s91 = scalar_select %p88, %s89, %s90
      %p94 = pneg %p88
      %p95 = scmp.eq.s32.totalorder %s15, 1
      %p96 = por %p94, %p95
      %p97 = scmp.ne.s32.totalorder %s89, %s92
      %p98 = scmp.eq.s32.totalorder %s15, 0
      %p99 = por %p97, %p98
      %p100 = scmp.ne.s32.totalorder %s89, %s92
      %p101 = scmp.eq.s32.totalorder %s20, 1
      %p102 = por %p100, %p101
      %p103 = scmp.ne.s32.totalorder %s92, %s93
      %p104 = scmp.eq.s32.totalorder %s20, 0
      %p105 = por %p103, %p104
      %p106 = scmp.ne.s32.totalorder %s92, %s93
      %p107 = scmp.eq.s32.totalorder %s21, 1
      %p108 = por %p106, %p107
      %p110 = scmp.ne.s32.totalorder %s93, %s109
      %p111 = scmp.eq.s32.totalorder %s21, 0
      %p112 = por %p110, %p111
      %s113 = ssub.s32 %s23, %s30
      %p114 = scmp.eq.s32.totalorder %s113, 0
      %s116 = sadd.s32 %s115, 1
      %s117 = scalar_select %p114, %s115, %s116
      %p120 = pneg %p114
      %p121 = scmp.eq.s32.totalorder %s15, 1
      %p122 = por %p120, %p121
      %p123 = scmp.ne.s32.totalorder %s115, %s118
      %p124 = scmp.eq.s32.totalorder %s15, 0
      %p125 = por %p123, %p124
      %p126 = scmp.ne.s32.totalorder %s115, %s118
      %p127 = scmp.eq.s32.totalorder %s20, 1
      %p128 = por %p126, %p127
      %p129 = scmp.ne.s32.totalorder %s118, %s119
      %p130 = scmp.eq.s32.totalorder %s20, 0
      %p131 = por %p129, %p130
      %p132 = scmp.ne.s32.totalorder %s118, %s119
      %p133 = scmp.eq.s32.totalorder %s21, 1
      %p134 = por %p132, %p133
      %p136 = scmp.ne.s32.totalorder %s119, %s135
      %p137 = scmp.eq.s32.totalorder %s21, 0
      %p138 = por %p136, %p137
      %s140 = sadd.s32 %s139, 1
      %p143 = scmp.eq.s32.totalorder %s15, 1
      %p144 = scmp.ne.s32.totalorder %s139, %s141
      %p145 = scmp.eq.s32.totalorder %s15, 0
      %p146 = por %p144, %p145
      %p147 = scmp.ne.s32.totalorder %s139, %s141
      %p148 = scmp.eq.s32.totalorder %s20, 1
      %p149 = por %p147, %p148
      %p150 = scmp.ne.s32.totalorder %s141, %s142
      %p151 = scmp.eq.s32.totalorder %s20, 0
      %p152 = por %p150, %p151
      %p153 = scmp.ne.s32.totalorder %s141, %s142
      %p154 = scmp.eq.s32.totalorder %s21, 1
      %p155 = por %p153, %p154
      %p157 = scmp.ne.s32.totalorder %s142, %s156
      %p158 = scmp.eq.s32.totalorder %s21, 0
      %p159 = por %p157, %p158
      %s161 = sadd.s32 %s160, 1
      %p164 = scmp.eq.s32.totalorder %s15, 1
      %p165 = scmp.ne.s32.totalorder %s160, %s162
      %p166 = scmp.eq.s32.totalorder %s15, 0
      %p167 = por %p165, %p166
      %p168 = scmp.ne.s32.totalorder %s160, %s162
      %p169 = scmp.eq.s32.totalorder %s20, 1
      %p170 = por %p168, %p169
      %p171 = scmp.ne.s32.totalorder %s162, %s163
      %p172 = scmp.eq.s32.totalorder %s20, 0
      %p173 = por %p171, %p172
      %p174 = scmp.ne.s32.totalorder %s162, %s163
      %p175 = scmp.eq.s32.totalorder %s21, 1
      %p176 = por %p174, %p175
      %p178 = scmp.ne.s32.totalorder %s163, %s177
      %p179 = scmp.eq.s32.totalorder %s21, 0
      %p180 = por %p178, %p179
      %s181 = ssub.s32 %s22, %s34
      %s182 = ssub.s32 %s23, %s30
      %s183 = sor.u32 %s181, %s182
      %p184 = scmp.eq.s32.totalorder %s183, 0
      %s186 = sadd.s32 %s185, 1
      %s187 = scalar_select %p184, %s185, %s186
      %p190 = pneg %p184
      %p191 = scmp.eq.s32.totalorder %s15, 1
      %p192 = por %p190, %p191
      %p193 = scmp.ne.s32.totalorder %s185, %s188
      %p194 = scmp.eq.s32.totalorder %s15, 0
      %p195 = por %p193, %p194
      %p196 = scmp.ne.s32.totalorder %s185, %s188
      %p197 = scmp.eq.s32.totalorder %s20, 1
      %p198 = por %p196, %p197
      %p199 = scmp.ne.s32.totalorder %s188, %s189
      %p200 = scmp.eq.s32.totalorder %s20, 0
      %p201 = por %p199, %p200
      %p202 = scmp.ne.s32.totalorder %s188, %s189
      %p203 = scmp.eq.s32.totalorder %s21, 1
      %p204 = por %p202, %p203
      %p206 = scmp.ne.s32.totalorder %s189, %s205
      %p207 = scmp.eq.s32.totalorder %s21, 0
      %p208 = por %p206, %p207
      %p209 = scmp.le.s32.totalorder 1, %s15
      %p210 = scmp.lt.s32.totalorder %s15, 3
      %p211 = pnand %p209, %p210
      %p212 = pneg %p211
      // Predicated region
      $region9: #{tpu_custom_call.1} parent=5 // pred_check
        _
      $region10: #{tpu_custom_call.1} parent=5 // pred_check_branch
        %214 = sbr.rel (%p211) target = $region12
      $region11: #{tpu_custom_call.1} parent=5 // pred_region
        %s215 = ssub.s32 %s15, 1
        // Predicated region
        $region13: #{tpu_custom_call.1} parent=11 // pred_check
          %p216 = pneg %p79
        $region14: #{tpu_custom_call.1} parent=11 // pred_check_branch
          %218 = sbr.rel (%p216) target = $region16
        $region15: #{tpu_custom_call.1} parent=11 // pred_region
          %s219 = smul.u32 4, %s25
          %p220 = scmp.lt.s32.totalorder %s219, 3
          %s221 = scalar_select %p220, %s219, 3
          %s222 = smul.addr %s221, 4
          %s223 = scalar_lea.vmem %s1, %s222
          %s224 = smul.u32 4, %s25
        $region16: #{tpu_custom_call.1} parent=11 // pred_fallthru
          _
        // Predicated region
        $region17: #{tpu_custom_call.1} parent=11 // pred_check
          %p225 = pneg %p105
        $region18: #{tpu_custom_call.1} parent=11 // pred_check_branch
          %227 = sbr.rel (%p225) target = $region20
        $region19: #{tpu_custom_call.1} parent=11 // pred_region
          %s228 = smul.u32 4, %s25
          %p229 = scmp.lt.s32.totalorder %s228, 3
          %s230 = scalar_select %p229, %s228, 3
          %s231 = smul.addr %s230, 8
          %s232 = scalar_lea.vmem %s2, %s231
          %s233 = smul.u32 4, %s25
        $region20: #{tpu_custom_call.1} parent=11 // pred_fallthru
          _
        // Predicated region
        $region21: #{tpu_custom_call.1} parent=11 // pred_check
          %p234 = pneg %p131
        $region22: #{tpu_custom_call.1} parent=11 // pred_check_branch
          %236 = sbr.rel (%p234) target = $region24
        $region23: #{tpu_custom_call.1} parent=11 // pred_region
          %s237 = smul.u32 4, %s25
          %p238 = scmp.lt.s32.totalorder %s237, 3
          %s239 = scalar_select %p238, %s237, 3
          %s240 = smul.addr %s239, 8
          %s241 = scalar_lea.vmem %s3, %s240
          %s242 = smul.u32 4, %s25
        $region24: #{tpu_custom_call.1} parent=11 // pred_fallthru
          _
        // Predicated region
        $region25: #{tpu_custom_call.1} parent=11 // pred_check
          %p243 = pneg %p152
        $region26: #{tpu_custom_call.1} parent=11 // pred_check_branch
          %245 = sbr.rel (%p243) target = $region28
        $region27: #{tpu_custom_call.1} parent=11 // pred_region
          _
        $region28: #{tpu_custom_call.1} parent=11 // pred_fallthru
          _
        // Predicated region
        $region29: #{tpu_custom_call.1} parent=11 // pred_check
          %p246 = pneg %p173
        $region30: #{tpu_custom_call.1} parent=11 // pred_check_branch
          %248 = sbr.rel (%p246) target = $region32
        $region31: #{tpu_custom_call.1} parent=11 // pred_region
          _
        $region32: #{tpu_custom_call.1} parent=11 // pred_fallthru
          _
      $region12: #{tpu_custom_call.1} parent=5 // pred_fallthru
        _
      %p249 = scmp.lt.s32.totalorder %s15, 2
      // Predicated region
      $region33: #{tpu_custom_call.1} parent=5 // pred_check
        %p250 = pneg %p249
      $region34: #{tpu_custom_call.1} parent=5 // pred_check_branch
        %252 = sbr.rel (%p250) target = $region36
      $region35: #{tpu_custom_call.1} parent=5 // pred_region
        // Predicated region
        $region37: #{tpu_custom_call.1} parent=35 // pred_check
          %p253 = pneg %p47
        $region38: #{tpu_custom_call.1} parent=35 // pred_check_branch
          %255 = sbr.rel (%p253) target = $region40
        $region39: #{tpu_custom_call.1} parent=35 // pred_region
          %p256 = scmp.lt.s32.totalorder %s22, 1
          %s257 = scalar_select %p256, %s22, 1
          %s258 = smul.addr %s257, 3
          %s259 = smul.addr %s258, 2
          %s260 = scalar_lea.vmem %s0, %s259
        $region40: #{tpu_custom_call.1} parent=35 // pred_fallthru
          _
      $region36: #{tpu_custom_call.1} parent=5 // pred_fallthru
        _
      %p261 = scmp.le.s32.totalorder 1, %s15
      %p262 = scmp.lt.s32.totalorder %s15, 3
      %p263 = pnand %p261, %p262
      %p264 = pneg %p263
      // Predicated region
      $region41: #{tpu_custom_call.1} parent=5 // pred_check
        _
      $region42: #{tpu_custom_call.1} parent=5 // pred_check_branch
        %266 = sbr.rel (%p263) target = $region44
      $region43: #{tpu_custom_call.1} parent=5 // pred_region
        %s267 = ssub.s32 %s15, 1
        %p268 = scmp.lt.s32.totalorder %s24, 1
        %s269 = scalar_select %p268, %s24, 1
        %s270 = smul.addr %s269, 3
        %s271 = smul.addr %s270, 2
        %s272 = scalar_lea.vmem %s0, %s271
        %p273 = pneg %p53
        %p274 = pneg %p50
        %s275 = smul.u32 4, %s25
        %p276 = scmp.lt.s32.totalorder %s275, 3
        %s277 = scalar_select %p276, %s275, 3
        %s278 = smul.addr %s277, 4
        %s279 = scalar_lea.vmem %s1, %s278
        %p280 = pneg %p79
        %p281 = pneg %p76
        %s282 = smul.u32 4, %s25
        %p283 = scmp.lt.s32.totalorder %s282, 3
        %s284 = scalar_select %p283, %s282, 3
        %s285 = smul.addr %s284, 8
        %s286 = scalar_lea.vmem %s2, %s285
        %p287 = pneg %p105
        %p288 = pneg %p102
        %s289 = smul.u32 4, %s25
        %p290 = scmp.lt.s32.totalorder %s289, 3
        %s291 = scalar_select %p290, %s289, 3
        %s292 = smul.addr %s291, 8
        %s293 = scalar_lea.vmem %s3, %s292
        %p294 = pneg %p131
        %p295 = pneg %p128
        %p296 = pneg %p152
        %p297 = pneg %p149
        %p298 = pneg %p173
        %p299 = pneg %p170
        %p300 = pneg %p201
        %p301 = pneg %p198
        %s302 = sand.u32 %s188, 1
        %s303 = scalar_lea.sflag [#allocation3], %s302
        %s304 = sand.u32 %s188, 1
        %s305 = smul.addr %s304, 64
        %s306 = scalar_lea.vmem [#allocation2], %s305
        %p307 = scmp.lt.s32.totalorder %s24, 1
        %s308 = scalar_select %p307, %s24, 1
        %s309 = smul.addr %s308, 3
        %s310 = smul.addr %s309, 2
        %s311 = scalar_lea.vmem %s0, %s310
        %s312 = smul.u32 4, %s25
        %p313 = scmp.lt.s32.totalorder %s312, 3
        %s314 = scalar_select %p313, %s312, 3
        %s315 = smul.addr %s314, 4
        %s316 = scalar_lea.vmem %s1, %s315
        %s317 = smul.u32 4, %s25
        %s318 = smul.u32 4, %s25
        %p319 = scmp.lt.s32.totalorder %s318, 3
        %s320 = scalar_select %p319, %s318, 3
        %s321 = smul.addr %s320, 8
        %s322 = scalar_lea.vmem %s2, %s321
        %s323 = smul.u32 4, %s25
        %s324 = smul.u32 4, %s25
        %p325 = scmp.lt.s32.totalorder %s324, 3
        %s326 = scalar_select %p325, %s324, 3
        %s327 = smul.addr %s326, 8
        %s328 = scalar_lea.vmem %s3, %s327
        %s329 = smul.u32 4, %s25
        %s330 = smul.u32 4, %s25
        %v332 = vld [vmem:[%s5] sm:$0x3]
        %v333 = vld [vmem:[%s311] sm:$0x3f]
        %v334 = vld [vmem:[%s311] sm:$0xf]
        %v337 = vunpack.c.l.s4 1966171168
        %v338 = vunpack.c.0.s8 %v337
        %v339 = vlaneseq
        %v340 = vshrl.u32 %v339, 7
        %v341 = vsub.s32 %v338, %v340
        %v342 = vrot.slane %v332, %v341
        %v343 = vcombine.high %v342, %v342
        %v345 = vunpack.c.l.s4 1966171168
        %v346 = vunpack.c.0.s8 %v345
        %v347 = vlaneseq
        %v348 = vshrl.u32 %v347, 7
        %v349 = vsub.s32 %v346, %v348
        %v350 = vrot.slane %v342, %v349
        %v352 = vunpack.c.l.s4 1966171168
        %v353 = vunpack.c.0.s8 %v352
        %v354 = vlaneseq
        %v355 = vshrl.u32 %v354, 7
        %v356 = vsub.s32 %v353, %v355
        %v357 = vrot.slane %v343, %v356
        %v359 = vpack.i.b16 %v350, %v350
        %v361 = vlaneseq
        %v362 = vshrl.u32 %v361, 7
        %v363 = vsub.s32 0, %v362
        %v364 = vrot.slane %v359, %v363
        %v366 = vpack.i.b16 %v357, %v357
        %v368 = vlaneseq
        %v369 = vshrl.u32 %v368, 7
        %v370 = vsub.s32 0, %v369
        %v371 = vrot.slane %v366, %v370
        %v374 = vcombine.low %v364, %v371
        %v376 = vunpack.c.l.s4 1983009808
        %v377 = vunpack.c.0.s8 %v376
        %v378 = vlaneseq
        %v379 = vshrl.u32 %v378, 7
        %v380 = vsub.s32 %v377, %v379
        %v381 = vrot.slane %v374, %v380
        %v383 = vmul.bf16 %v334, %v381
        %v384 = vshrl.u32 %v350, 16
        %v385 = vpack.i.b16 %v384, %v384
        %v387 = vlaneseq
        %v388 = vshrl.u32 %v387, 7
        %v389 = vsub.s32 0, %v388
        %v390 = vrot.slane %v385, %v389
        %v391 = vshrl.u32 %v357, 16
        %v392 = vpack.i.b16 %v391, %v391
        %v394 = vlaneseq
        %v395 = vshrl.u32 %v394, 7
        %v396 = vsub.s32 0, %v395
        %v397 = vrot.slane %v392, %v396
        %v400 = vcombine.low %v390, %v397
        %v402 = vunpack.c.l.s4 1983009808
        %v403 = vunpack.c.0.s8 %v402
        %v404 = vlaneseq
        %v405 = vshrl.u32 %v404, 7
        %v406 = vsub.s32 %v403, %v405
        %v407 = vrot.slane %v400, %v406
        %408 = vrot.lane.b32.xlu0 %v407, 2
        %v409 = vpop.permute.xlu0 %408
        %v410 = vrot.slane %v409, 6
        %vm411 = vcmask 15360
        %v412 = vsel %vm411, %v410, %v409
        %v414 = vmul.bf16 %v333, %v412
        %s415 = scalar_lea.vmem %s316, 16
        %v416 = vld [vmem:[%s415] sm:$0xf]
        %v417 = vld [vmem:[%s415 + $0x4] sm:$0xf]
        %v418 = vld [vmem:[%s415 + $0x8] sm:$0xf]
        %v419 = vld [vmem:[%s415 + $0xc] sm:$0xf]
        %v420 = vld [vmem:[%s316] sm:$0xf]
        %v421 = vld [vmem:[%s316 + $0x4] sm:$0xf]
        %v422 = vld [vmem:[%s316 + $0x8] sm:$0xf]
        %v423 = vld [vmem:[%s316 + $0xc] sm:$0xf]
        %v428 = vunpack.c.l.b16 %v420
        %v429 = vunpack.c.l.b16 %v421
        %v430 = vunpack.c.l.b16 %v422
        %v431 = vunpack.c.l.b16 %v423
        %v432 = vpack.c.b16 %v429, %v428
        %v433 = vpack.c.b16 %v431, %v430
        %v436 = vunpack.c.l.s4 1983009808
        %v437 = vunpack.c.0.s8 %v436
        %v438 = vlaneseq
        %v439 = vshrl.u32 %v438, 7
        %v440 = vsub.s32 %v437, %v439
        %v441 = vrot.slane %v383, %v440
        %v442 = vcombine.high %v441, %v441
        %vm443 = vcmask 31744
        %v445 = vsel %vm443, %v432, 0
        %v448 = vsel %vm443, %v433, 0
        %vm450 = vcmask 1041408
        %v452 = vsel %vm450, %v441, 0
        %v455 = vsel %vm450, %v442, 0
        %457 = vmatprep.subr.bf16.mxu0 0
        %458 = vmatpush1.bf16.msra.mxu0 0
        %459 = vmatprep.subr.bf16.mxu0 0
        %460 = vmatpush1.bf16.msra.mxu0 0
        %461 = vmatprep.subr.bf16.mxu0 0
        %462 = vmatpush1.bf16.msra.mxu0 0
        %463 = vmatprep.subr.bf16.mxu0 0
        %464 = vmatpush1.bf16.msra.mxu0 0
        %465 = vmatprep.subr.bf16.mxu0 0
        %466 = vmatpush1.bf16.msra.mxu0 0
        %467 = vmatprep.subr.bf16.mxu0 0
        %468 = vmatpush1.bf16.msra.mxu0 0
        %469 = vmatprep.subr.bf16.mxu0 0
        %470 = vmatpush1.bf16.msra.mxu0 0
        %471 = vmatprep.subr.bf16.mxu0 %v455
        %472 = vmatpush1.bf16.msra.mxu0 %v452
        %473 = vmatprep.subr.bf16.mxu0 0
        %474 = vmatpush2.bf16.msra.mxu0 0
        %475 = vmatprep.subr.bf16.mxu0 0
        %476 = vmatpush2.bf16.msra.mxu0 0
        %477 = vmatprep.subr.bf16.mxu0 0
        %478 = vmatpush2.bf16.msra.mxu0 0
        %479 = vmatprep.subr.bf16.mxu0 0
        %480 = vmatpush2.bf16.msra.mxu0 0
        %481 = vmatprep.subr.bf16.mxu0 0
        %482 = vmatpush2.bf16.msra.mxu0 0
        %483 = vmatprep.subr.bf16.mxu0 0
        %484 = vmatpush2.bf16.msra.mxu0 0
        %485 = vmatprep.subr.bf16.mxu0 0
        %486 = vmatpush2.bf16.msra.mxu0 0
        %487 = vmatprep.subr.bf16.mxu0 0
        %488 = vmatpush2.bf16.msra.mxu0 0
        %489 = vmatprep.mubr.bf16.mxu0 0
        %490 = vmatmul.mubr.bf16.gmra.mxu0 %v445
        %v491 = vpop.f32.mrf.mxu0
        %v492 = vadd.f32 0.0, %v491
        %v493 = vpop.f32.mrf.mxu0
        %v494 = vadd.f32 0.0, %v493
        %v495 = vpop.f32.mrf.mxu0
        %v496 = vadd.f32 0.0, %v495
        %v497 = vpop.f32.mrf.mxu0
        %v498 = vadd.f32 0.0, %v497
        %499 = vmatprep.mubr.bf16.mxu0 0
        %500 = vmatmul.mubr.bf16.gmra.mxu0 %v448
        %v501 = vpop.f32.mrf.mxu0
        %v502 = vadd.f32 0.0, %v501
        %v503 = vpop.f32.mrf.mxu0
        %v504 = vadd.f32 0.0, %v503
        %v505 = vpop.f32.mrf.mxu0
        %v506 = vadd.f32 0.0, %v505
        %v507 = vpop.f32.mrf.mxu0
        %v508 = vadd.f32 0.0, %v507
        %509 = vdwg.mxu0
        %v514 = vunpack.c.l.b16 %v416
        %v515 = vunpack.c.l.b16 %v417
        %v516 = vunpack.c.l.b16 %v418
        %v517 = vunpack.c.l.b16 %v419
        %v518 = vpack.c.b16 %v515, %v514
        %v519 = vpack.c.b16 %v517, %v516
        %v521 = vcombine.high %v333, %v333
        %v523 = vunpack.c.l.s4 1983009808
        %v524 = vunpack.c.0.s8 %v523
        %v525 = vlaneseq
        %v526 = vshrl.u32 %v525, 7
        %v527 = vsub.s32 %v524, %v526
        %v528 = vrot.slane %v333, %v527
        %v530 = vunpack.c.l.s4 1983009808
        %v531 = vunpack.c.0.s8 %v530
        %v532 = vlaneseq
        %v533 = vshrl.u32 %v532, 7
        %v534 = vsub.s32 %v531, %v533
        %v535 = vrot.slane %v521, %v534
        %v536 = vcombine.high %v528, %v528
        %537 = vrot.lane.b32.xlu0 %v528, 127
        %v538 = vpop.permute.xlu0 %537
        %539 = vrot.lane.b32.xlu0 %v536, 127
        %v540 = vpop.permute.xlu0 %539
        %541 = vrot.lane.b32.xlu0 %v535, 127
        %v542 = vpop.permute.xlu0 %541
        %vm543 = vcmask 1039360
        %v544 = vsel %vm543, %v538, %v540
        %v545 = vsel %vm543, %v540, %v542
        %v547 = vsel %vm443, %v518, 0
        %v550 = vsel %vm443, %v519, 0
        %v553 = vsel %vm450, %v544, 0
        %v556 = vsel %vm450, %v545, 0
        %558 = vmatprep.subr.bf16.mxu0 0
        %559 = vmatpush1.bf16.msra.mxu0 0
        %560 = vmatprep.subr.bf16.mxu0 0
        %561 = vmatpush1.bf16.msra.mxu0 0
        %562 = vmatprep.subr.bf16.mxu0 0
        %563 = vmatpush1.bf16.msra.mxu0 0
        %564 = vmatprep.subr.bf16.mxu0 0
        %565 = vmatpush1.bf16.msra.mxu0 0
        %566 = vmatprep.subr.bf16.mxu0 0
        %567 = vmatpush1.bf16.msra.mxu0 0
        %568 = vmatprep.subr.bf16.mxu0 0
        %569 = vmatpush1.bf16.msra.mxu0 0
        %570 = vmatprep.subr.bf16.mxu0 0
        %571 = vmatpush1.bf16.msra.mxu0 0
        %572 = vmatprep.subr.bf16.mxu0 %v556
        %573 = vmatpush1.bf16.msra.mxu0 %v553
        %574 = vmatprep.subr.bf16.mxu0 0
        %575 = vmatpush2.bf16.msra.mxu0 0
        %576 = vmatprep.subr.bf16.mxu0 0
        %577 = vmatpush2.bf16.msra.mxu0 0
        %578 = vmatprep.subr.bf16.mxu0 0
        %579 = vmatpush2.bf16.msra.mxu0 0
        %580 = vmatprep.subr.bf16.mxu0 0
        %581 = vmatpush2.bf16.msra.mxu0 0
        %582 = vmatprep.subr.bf16.mxu0 0
        %583 = vmatpush2.bf16.msra.mxu0 0
        %584 = vmatprep.subr.bf16.mxu0 0
        %585 = vmatpush2.bf16.msra.mxu0 0
        %586 = vmatprep.subr.bf16.mxu0 0
        %587 = vmatpush2.bf16.msra.mxu0 0
        %588 = vmatprep.subr.bf16.mxu0 0
        %589 = vmatpush2.bf16.msra.mxu0 0
        %590 = vmatprep.mubr.bf16.mxu0 0
        %591 = vmatmul.mubr.bf16.gmra.mxu0 %v547
        %v592 = vpop.f32.mrf.mxu0
        %v593 = vadd.f32 %v492, %v592
        %v594 = vpop.f32.mrf.mxu0
        %v595 = vadd.f32 %v494, %v594
        %v596 = vpop.f32.mrf.mxu0
        %v597 = vadd.f32 %v496, %v596
        %v598 = vpop.f32.mrf.mxu0
        %v599 = vadd.f32 %v498, %v598
        %600 = vmatprep.mubr.bf16.mxu0 0
        %601 = vmatmul.mubr.bf16.gmra.mxu0 %v550
        %v602 = vpop.f32.mrf.mxu0
        %v603 = vadd.f32 %v502, %v602
        %v604 = vpop.f32.mrf.mxu0
        %v605 = vadd.f32 %v504, %v604
        %v606 = vpop.f32.mrf.mxu0
        %v607 = vadd.f32 %v506, %v606
        %v608 = vpop.f32.mrf.mxu0
        %v609 = vadd.f32 %v508, %v608
        %610 = vdwg.mxu0
        %s611 = scalar_lea.vmem %s316, 32
        %v612 = vld [vmem:[%s611] sm:$0xf]
        %v613 = vld [vmem:[%s611 + $0x4] sm:$0xf]
        %v614 = vld [vmem:[%s611 + $0x8] sm:$0xf]
        %v615 = vld [vmem:[%s611 + $0xc] sm:$0xf]
        %v620 = vunpack.c.l.b16 %v612
        %v621 = vunpack.c.l.b16 %v613
        %v622 = vunpack.c.l.b16 %v614
        %v623 = vunpack.c.l.b16 %v615
        %v624 = vpack.c.b16 %v621, %v620
        %v625 = vpack.c.b16 %v623, %v622
        %v627 = vcombine.high %v414, %v414
        %v629 = vunpack.c.l.s4 1983009808
        %v630 = vunpack.c.0.s8 %v629
        %v631 = vlaneseq
        %v632 = vshrl.u32 %v631, 7
        %v633 = vsub.s32 %v630, %v632
        %v634 = vrot.slane %v414, %v633
        %v636 = vunpack.c.l.s4 1983009808
        %v637 = vunpack.c.0.s8 %v636
        %v638 = vlaneseq
        %v639 = vshrl.u32 %v638, 7
        %v640 = vsub.s32 %v637, %v639
        %v641 = vrot.slane %v627, %v640
        %v642 = vcombine.high %v634, %v634
        %643 = vrot.lane.b32.xlu0 %v634, 126
        %v644 = vpop.permute.xlu0 %643
        %645 = vrot.lane.b32.xlu0 %v642, 126
        %v646 = vpop.permute.xlu0 %645
        %647 = vrot.lane.b32.xlu0 %v641, 126
        %v648 = vpop.permute.xlu0 %647
        %vm649 = vcmask 1031168
        %v650 = vsel %vm649, %v644, %v646
        %v651 = vsel %vm649, %v646, %v648
        %v653 = vsel %vm443, %v624, 0
        %v656 = vsel %vm443, %v625, 0
        %v659 = vsel %vm450, %v650, 0
        %v662 = vsel %vm450, %v651, 0
        %664 = vmatprep.subr.bf16.mxu0 0
        %665 = vmatpush1.bf16.msra.mxu0 0
        %666 = vmatprep.subr.bf16.mxu0 0
        %667 = vmatpush1.bf16.msra.mxu0 0
        %668 = vmatprep.subr.bf16.mxu0 0
        %669 = vmatpush1.bf16.msra.mxu0 0
        %670 = vmatprep.subr.bf16.mxu0 0
        %671 = vmatpush1.bf16.msra.mxu0 0
        %672 = vmatprep.subr.bf16.mxu0 0
        %673 = vmatpush1.bf16.msra.mxu0 0
        %674 = vmatprep.subr.bf16.mxu0 0
        %675 = vmatpush1.bf16.msra.mxu0 0
        %676 = vmatprep.subr.bf16.mxu0 0
        %677 = vmatpush1.bf16.msra.mxu0 0
        %678 = vmatprep.subr.bf16.mxu0 %v662
        %679 = vmatpush1.bf16.msra.mxu0 %v659
        %680 = vmatprep.subr.bf16.mxu0 0
        %681 = vmatpush2.bf16.msra.mxu0 0
        %682 = vmatprep.subr.bf16.mxu0 0
        %683 = vmatpush2.bf16.msra.mxu0 0
        %684 = vmatprep.subr.bf16.mxu0 0
        %685 = vmatpush2.bf16.msra.mxu0 0
        %686 = vmatprep.subr.bf16.mxu0 0
        %687 = vmatpush2.bf16.msra.mxu0 0
        %688 = vmatprep.subr.bf16.mxu0 0
        %689 = vmatpush2.bf16.msra.mxu0 0
        %690 = vmatprep.subr.bf16.mxu0 0
        %691 = vmatpush2.bf16.msra.mxu0 0
        %692 = vmatprep.subr.bf16.mxu0 0
        %693 = vmatpush2.bf16.msra.mxu0 0
        %694 = vmatprep.subr.bf16.mxu0 0
        %695 = vmatpush2.bf16.msra.mxu0 0
        %696 = vmatprep.mubr.bf16.mxu0 0
        %697 = vmatmul.mubr.bf16.gmra.mxu0 %v653
        %v698 = vpop.f32.mrf.mxu0
        %v699 = vadd.f32 0.0, %v698
        %v700 = vpop.f32.mrf.mxu0
        %v701 = vadd.f32 0.0, %v700
        %v702 = vpop.f32.mrf.mxu0
        %v703 = vadd.f32 0.0, %v702
        %v704 = vpop.f32.mrf.mxu0
        %v705 = vadd.f32 0.0, %v704
        %706 = vmatprep.mubr.bf16.mxu0 0
        %707 = vmatmul.mubr.bf16.gmra.mxu0 %v656
        %v708 = vpop.f32.mrf.mxu0
        %v709 = vadd.f32 0.0, %v708
        %v710 = vpop.f32.mrf.mxu0
        %v711 = vadd.f32 0.0, %v710
        %v712 = vpop.f32.mrf.mxu0
        %v713 = vadd.f32 0.0, %v712
        %v714 = vpop.f32.mrf.mxu0
        %v715 = vadd.f32 0.0, %v714
        %716 = vdwg.mxu0
        %v717 = vadd.f32 %v593, %v699
        %v718 = vadd.f32 %v595, %v701
        %v719 = vadd.f32 %v597, %v703
        %v720 = vadd.f32 %v599, %v705
        %v721 = vadd.f32 %v603, %v709
        %v722 = vadd.f32 %v605, %v711
        %v723 = vadd.f32 %v607, %v713
        %v724 = vadd.f32 %v609, %v715
        %v725 = vld [vmem:[%s311] sm:$0x3f]
        %726 = vrot.lane.b32.xlu0 %v381, 16
        %v727 = vpop.permute.xlu0 %726
        %v728 = vrot.slane %v727, 6
        %vm729 = vcmask 130048
        %v730 = vsel %vm729, %v728, %v727
        %v732 = vmul.bf16 %v725, %v730
        %733 = vrot.lane.b32.xlu0 %v407, 18
        %v734 = vpop.permute.xlu0 %733
        %v735 = vrot.slane %v734, 6
        %vm736 = vcmask 146432
        %v737 = vsel %vm736, %v735, %v734
        %v739 = vmul.bf16 %v725, %v737
        %s740 = scalar_lea.vmem %s316, 64
        %v741 = vld [vmem:[%s740] sm:$0xf]
        %v742 = vld [vmem:[%s740 + $0x4] sm:$0xf]
        %v743 = vld [vmem:[%s740 + $0x8] sm:$0xf]
        %v744 = vld [vmem:[%s740 + $0xc] sm:$0xf]
        %v749 = vunpack.c.l.b16 %v741
        %v750 = vunpack.c.l.b16 %v742
        %v751 = vunpack.c.l.b16 %v743
        %v752 = vunpack.c.l.b16 %v744
        %v753 = vpack.c.b16 %v750, %v749
        %v754 = vpack.c.b16 %v752, %v751
        %v756 = vcombine.high %v725, %v725
        %v758 = vunpack.c.l.s4 1983009808
        %v759 = vunpack.c.0.s8 %v758
        %v760 = vlaneseq
        %v761 = vshrl.u32 %v760, 7
        %v762 = vsub.s32 %v759, %v761
        %v763 = vrot.slane %v725, %v762
        %v765 = vunpack.c.l.s4 1983009808
        %v766 = vunpack.c.0.s8 %v765
        %v767 = vlaneseq
        %v768 = vshrl.u32 %v767, 7
        %v769 = vsub.s32 %v766, %v768
        %v770 = vrot.slane %v756, %v769
        %v771 = vcombine.high %v763, %v763
        %772 = vrot.lane.b32.xlu0 %v763, 111
        %v773 = vpop.permute.xlu0 %772
        %774 = vrot.lane.b32.xlu0 %v771, 111
        %v775 = vpop.permute.xlu0 %774
        %776 = vrot.lane.b32.xlu0 %v770, 111
        %v777 = vpop.permute.xlu0 %776
        %vm778 = vcmask 908288
        %v779 = vsel %vm778, %v773, %v775
        %v780 = vsel %vm778, %v775, %v777
        %v782 = vsel %vm443, %v753, 0
        %v785 = vsel %vm443, %v754, 0
        %v788 = vsel %vm450, %v779, 0
        %v791 = vsel %vm450, %v780, 0
        %793 = vmatprep.subr.bf16.mxu0 0
        %794 = vmatpush1.bf16.msra.mxu0 0
        %795 = vmatprep.subr.bf16.mxu0 0
        %796 = vmatpush1.bf16.msra.mxu0 0
        %797 = vmatprep.subr.bf16.mxu0 0
        %798 = vmatpush1.bf16.msra.mxu0 0
        %799 = vmatprep.subr.bf16.mxu0 0
        %800 = vmatpush1.bf16.msra.mxu0 0
        %801 = vmatprep.subr.bf16.mxu0 0
        %802 = vmatpush1.bf16.msra.mxu0 0
        %803 = vmatprep.subr.bf16.mxu0 0
        %804 = vmatpush1.bf16.msra.mxu0 0
        %805 = vmatprep.subr.bf16.mxu0 0
        %806 = vmatpush1.bf16.msra.mxu0 0
        %807 = vmatprep.subr.bf16.mxu0 %v791
        %808 = vmatpush1.bf16.msra.mxu0 %v788
        %809 = vmatprep.subr.bf16.mxu0 0
        %810 = vmatpush2.bf16.msra.mxu0 0
        %811 = vmatprep.subr.bf16.mxu0 0
        %812 = vmatpush2.bf16.msra.mxu0 0
        %813 = vmatprep.subr.bf16.mxu0 0
        %814 = vmatpush2.bf16.msra.mxu0 0
        %815 = vmatprep.subr.bf16.mxu0 0
        %816 = vmatpush2.bf16.msra.mxu0 0
        %817 = vmatprep.subr.bf16.mxu0 0
        %818 = vmatpush2.bf16.msra.mxu0 0
        %819 = vmatprep.subr.bf16.mxu0 0
        %820 = vmatpush2.bf16.msra.mxu0 0
        %821 = vmatprep.subr.bf16.mxu0 0
        %822 = vmatpush2.bf16.msra.mxu0 0
        %823 = vmatprep.subr.bf16.mxu0 0
        %824 = vmatpush2.bf16.msra.mxu0 0
        %825 = vmatprep.mubr.bf16.mxu0 0
        %826 = vmatmul.mubr.bf16.gmra.mxu0 %v782
        %v827 = vpop.f32.mrf.mxu0
        %v828 = vadd.f32 0.0, %v827
        %v829 = vpop.f32.mrf.mxu0
        %v830 = vadd.f32 0.0, %v829
        %v831 = vpop.f32.mrf.mxu0
        %v832 = vadd.f32 0.0, %v831
        %v833 = vpop.f32.mrf.mxu0
        %v834 = vadd.f32 0.0, %v833
        %835 = vmatprep.mubr.bf16.mxu0 0
        %836 = vmatmul.mubr.bf16.gmra.mxu0 %v785
        %v837 = vpop.f32.mrf.mxu0
        %v838 = vadd.f32 0.0, %v837
        %v839 = vpop.f32.mrf.mxu0
        %v840 = vadd.f32 0.0, %v839
        %v841 = vpop.f32.mrf.mxu0
        %v842 = vadd.f32 0.0, %v841
        %v843 = vpop.f32.mrf.mxu0
        %v844 = vadd.f32 0.0, %v843
        %845 = vdwg.mxu0
        %v846 = vadd.f32 %v717, %v828
        %v847 = vadd.f32 %v718, %v830
        %v848 = vadd.f32 %v719, %v832
        %v849 = vadd.f32 %v720, %v834
        %v850 = vadd.f32 %v721, %v838
        %v851 = vadd.f32 %v722, %v840
        %v852 = vadd.f32 %v723, %v842
        %v853 = vadd.f32 %v724, %v844
        %s854 = scalar_lea.vmem %s316, 48
        %v855 = vld [vmem:[%s854] sm:$0xf]
        %v856 = vld [vmem:[%s854 + $0x4] sm:$0xf]
        %v857 = vld [vmem:[%s854 + $0x8] sm:$0xf]
        %v858 = vld [vmem:[%s854 + $0xc] sm:$0xf]
        %v863 = vunpack.c.l.b16 %v855
        %v864 = vunpack.c.l.b16 %v856
        %v865 = vunpack.c.l.b16 %v857
        %v866 = vunpack.c.l.b16 %v858
        %v867 = vpack.c.b16 %v864, %v863
        %v868 = vpack.c.b16 %v866, %v865
        %v870 = vcombine.high %v732, %v732
        %v872 = vunpack.c.l.s4 1983009808
        %v873 = vunpack.c.0.s8 %v872
        %v874 = vlaneseq
        %v875 = vshrl.u32 %v874, 7
        %v876 = vsub.s32 %v873, %v875
        %v877 = vrot.slane %v732, %v876
        %v879 = vunpack.c.l.s4 1983009808
        %v880 = vunpack.c.0.s8 %v879
        %v881 = vlaneseq
        %v882 = vshrl.u32 %v881, 7
        %v883 = vsub.s32 %v880, %v882
        %v884 = vrot.slane %v870, %v883
        %v885 = vcombine.high %v877, %v877
        %886 = vrot.lane.b32.xlu0 %v877, 112
        %v887 = vpop.permute.xlu0 %886
        %888 = vrot.lane.b32.xlu0 %v885, 112
        %v889 = vpop.permute.xlu0 %888
        %890 = vrot.lane.b32.xlu0 %v884, 112
        %v891 = vpop.permute.xlu0 %890
        %vm892 = vcmask 916480
        %v893 = vsel %vm892, %v887, %v889
        %v894 = vsel %vm892, %v889, %v891
        %v896 = vsel %vm443, %v867, 0
        %v899 = vsel %vm443, %v868, 0
        %v902 = vsel %vm450, %v893, 0
        %v905 = vsel %vm450, %v894, 0
        %907 = vmatprep.subr.bf16.mxu0 0
        %908 = vmatpush1.bf16.msra.mxu0 0
        %909 = vmatprep.subr.bf16.mxu0 0
        %910 = vmatpush1.bf16.msra.mxu0 0
        %911 = vmatprep.subr.bf16.mxu0 0
        %912 = vmatpush1.bf16.msra.mxu0 0
        %913 = vmatprep.subr.bf16.mxu0 0
        %914 = vmatpush1.bf16.msra.mxu0 0
        %915 = vmatprep.subr.bf16.mxu0 0
        %916 = vmatpush1.bf16.msra.mxu0 0
        %917 = vmatprep.subr.bf16.mxu0 0
        %918 = vmatpush1.bf16.msra.mxu0 0
        %919 = vmatprep.subr.bf16.mxu0 0
        %920 = vmatpush1.bf16.msra.mxu0 0
        %921 = vmatprep.subr.bf16.mxu0 %v905
        %922 = vmatpush1.bf16.msra.mxu0 %v902
        %923 = vmatprep.subr.bf16.mxu0 0
        %924 = vmatpush2.bf16.msra.mxu0 0
        %925 = vmatprep.subr.bf16.mxu0 0
        %926 = vmatpush2.bf16.msra.mxu0 0
        %927 = vmatprep.subr.bf16.mxu0 0
        %928 = vmatpush2.bf16.msra.mxu0 0
        %929 = vmatprep.subr.bf16.mxu0 0
        %930 = vmatpush2.bf16.msra.mxu0 0
        %931 = vmatprep.subr.bf16.mxu0 0
        %932 = vmatpush2.bf16.msra.mxu0 0
        %933 = vmatprep.subr.bf16.mxu0 0
        %934 = vmatpush2.bf16.msra.mxu0 0
        %935 = vmatprep.subr.bf16.mxu0 0
        %936 = vmatpush2.bf16.msra.mxu0 0
        %937 = vmatprep.subr.bf16.mxu0 0
        %938 = vmatpush2.bf16.msra.mxu0 0
        %939 = vmatprep.mubr.bf16.mxu0 0
        %940 = vmatmul.mubr.bf16.gmra.mxu0 %v896
        %v941 = vpop.f32.mrf.mxu0
        %v942 = vadd.f32 0.0, %v941
        %v943 = vpop.f32.mrf.mxu0
        %v944 = vadd.f32 0.0, %v943
        %v945 = vpop.f32.mrf.mxu0
        %v946 = vadd.f32 0.0, %v945
        %v947 = vpop.f32.mrf.mxu0
        %v948 = vadd.f32 0.0, %v947
        %949 = vmatprep.mubr.bf16.mxu0 0
        %950 = vmatmul.mubr.bf16.gmra.mxu0 %v899
        %v951 = vpop.f32.mrf.mxu0
        %v952 = vadd.f32 0.0, %v951
        %v953 = vpop.f32.mrf.mxu0
        %v954 = vadd.f32 0.0, %v953
        %v955 = vpop.f32.mrf.mxu0
        %v956 = vadd.f32 0.0, %v955
        %v957 = vpop.f32.mrf.mxu0
        %v958 = vadd.f32 0.0, %v957
        %959 = vdwg.mxu0
        %v960 = vadd.f32 %v846, %v942
        %v961 = vadd.f32 %v847, %v944
        %v962 = vadd.f32 %v848, %v946
        %v963 = vadd.f32 %v849, %v948
        %v964 = vadd.f32 %v850, %v952
        %v965 = vadd.f32 %v851, %v954
        %v966 = vadd.f32 %v852, %v956
        %v967 = vadd.f32 %v853, %v958
        %s968 = scalar_lea.vmem %s316, 80
        %v969 = vld [vmem:[%s968] sm:$0xf]
        %v970 = vld [vmem:[%s968 + $0x4] sm:$0xf]
        %v971 = vld [vmem:[%s968 + $0x8] sm:$0xf]
        %v972 = vld [vmem:[%s968 + $0xc] sm:$0xf]
        %v977 = vunpack.c.l.b16 %v969
        %v978 = vunpack.c.l.b16 %v970
        %v979 = vunpack.c.l.b16 %v971
        %v980 = vunpack.c.l.b16 %v972
        %v981 = vpack.c.b16 %v978, %v977
        %v982 = vpack.c.b16 %v980, %v979
        %v984 = vcombine.high %v739, %v739
        %v986 = vunpack.c.l.s4 1983009808
        %v987 = vunpack.c.0.s8 %v986
        %v988 = vlaneseq
        %v989 = vshrl.u32 %v988, 7
        %v990 = vsub.s32 %v987, %v989
        %v991 = vrot.slane %v739, %v990
        %v993 = vunpack.c.l.s4 1983009808
        %v994 = vunpack.c.0.s8 %v993
        %v995 = vlaneseq
        %v996 = vshrl.u32 %v995, 7
        %v997 = vsub.s32 %v994, %v996
        %v998 = vrot.slane %v984, %v997
        %v999 = vcombine.high %v991, %v991
        %1000 = vrot.lane.b32.xlu0 %v991, 110
        %v1001 = vpop.permute.xlu0 %1000
        %1002 = vrot.lane.b32.xlu0 %v999, 110
        %v1003 = vpop.permute.xlu0 %1002
        %1004 = vrot.lane.b32.xlu0 %v998, 110
        %v1005 = vpop.permute.xlu0 %1004
        %vm1006 = vcmask 900096
        %v1007 = vsel %vm1006, %v1001, %v1003
        %v1008 = vsel %vm1006, %v1003, %v1005
        %v1010 = vsel %vm443, %v981, 0
        %v1013 = vsel %vm443, %v982, 0
        %v1016 = vsel %vm450, %v1007, 0
        %v1019 = vsel %vm450, %v1008, 0
        %1021 = vmatprep.subr.bf16.mxu0 0
        %1022 = vmatpush1.bf16.msra.mxu0 0
        %1023 = vmatprep.subr.bf16.mxu0 0
        %1024 = vmatpush1.bf16.msra.mxu0 0
        %1025 = vmatprep.subr.bf16.mxu0 0
        %1026 = vmatpush1.bf16.msra.mxu0 0
        %1027 = vmatprep.subr.bf16.mxu0 0
        %1028 = vmatpush1.bf16.msra.mxu0 0
        %1029 = vmatprep.subr.bf16.mxu0 0
        %1030 = vmatpush1.bf16.msra.mxu0 0
        %1031 = vmatprep.subr.bf16.mxu0 0
        %1032 = vmatpush1.bf16.msra.mxu0 0
        %1033 = vmatprep.subr.bf16.mxu0 0
        %1034 = vmatpush1.bf16.msra.mxu0 0
        %1035 = vmatprep.subr.bf16.mxu0 %v1019
        %1036 = vmatpush1.bf16.msra.mxu0 %v1016
        %1037 = vmatprep.subr.bf16.mxu0 0
        %1038 = vmatpush2.bf16.msra.mxu0 0
        %1039 = vmatprep.subr.bf16.mxu0 0
        %1040 = vmatpush2.bf16.msra.mxu0 0
        %1041 = vmatprep.subr.bf16.mxu0 0
        %1042 = vmatpush2.bf16.msra.mxu0 0
        %1043 = vmatprep.subr.bf16.mxu0 0
        %1044 = vmatpush2.bf16.msra.mxu0 0
        %1045 = vmatprep.subr.bf16.mxu0 0
        %1046 = vmatpush2.bf16.msra.mxu0 0
        %1047 = vmatprep.subr.bf16.mxu0 0
        %1048 = vmatpush2.bf16.msra.mxu0 0
        %1049 = vmatprep.subr.bf16.mxu0 0
        %1050 = vmatpush2.bf16.msra.mxu0 0
        %1051 = vmatprep.subr.bf16.mxu0 0
        %1052 = vmatpush2.bf16.msra.mxu0 0
        %1053 = vmatprep.mubr.bf16.mxu0 0
        %1054 = vmatmul.mubr.bf16.gmra.mxu0 %v1010
        %v1055 = vpop.f32.mrf.mxu0
        %v1056 = vadd.f32 0.0, %v1055
        %v1057 = vpop.f32.mrf.mxu0
        %v1058 = vadd.f32 0.0, %v1057
        %v1059 = vpop.f32.mrf.mxu0
        %v1060 = vadd.f32 0.0, %v1059
        %v1061 = vpop.f32.mrf.mxu0
        %v1062 = vadd.f32 0.0, %v1061
        %1063 = vmatprep.mubr.bf16.mxu0 0
        %1064 = vmatmul.mubr.bf16.gmra.mxu0 %v1013
        %v1065 = vpop.f32.mrf.mxu0
        %v1066 = vadd.f32 0.0, %v1065
        %v1067 = vpop.f32.mrf.mxu0
        %v1068 = vadd.f32 0.0, %v1067
        %v1069 = vpop.f32.mrf.mxu0
        %v1070 = vadd.f32 0.0, %v1069
        %v1071 = vpop.f32.mrf.mxu0
        %v1072 = vadd.f32 0.0, %v1071
        %1073 = vdwg.mxu0
        %v1074 = vadd.f32 %v960, %v1056
        %v1075 = vadd.f32 %v961, %v1058
        %v1076 = vadd.f32 %v962, %v1060
        %v1077 = vadd.f32 %v963, %v1062
        %v1078 = vadd.f32 %v964, %v1066
        %v1079 = vadd.f32 %v965, %v1068
        %v1080 = vadd.f32 %v966, %v1070
        %v1081 = vadd.f32 %v967, %v1072
        %v1082 = vld [vmem:[%s311] sm:$0x3f]
        %1083 = vrot.lane.b32.xlu0 %v381, 32
        %v1084 = vpop.permute.xlu0 %1083
        %v1085 = vrot.slane %v1084, 6
        %vm1086 = vcmask 261120
        %v1087 = vsel %vm1086, %v1085, %v1084
        %v1089 = vmul.bf16 %v1082, %v1087
        %1090 = vrot.lane.b32.xlu0 %v407, 34
        %v1091 = vpop.permute.xlu0 %1090
        %v1092 = vrot.slane %v1091, 6
        %vm1093 = vcmask 277504
        %v1094 = vsel %vm1093, %v1092, %v1091
        %v1096 = vmul.bf16 %v1082, %v1094
        %s1097 = scalar_lea.vmem %s316, 112
        %v1098 = vld [vmem:[%s1097] sm:$0xf]
        %v1099 = vld [vmem:[%s1097 + $0x4] sm:$0xf]
        %v1100 = vld [vmem:[%s1097 + $0x8] sm:$0xf]
        %v1101 = vld [vmem:[%s1097 + $0xc] sm:$0xf]
        %v1106 = vunpack.c.l.b16 %v1098
        %v1107 = vunpack.c.l.b16 %v1099
        %v1108 = vunpack.c.l.b16 %v1100
        %v1109 = vunpack.c.l.b16 %v1101
        %v1110 = vpack.c.b16 %v1107, %v1106
        %v1111 = vpack.c.b16 %v1109, %v1108
        %v1113 = vcombine.high %v1082, %v1082
        %v1115 = vunpack.c.l.s4 1983009808
        %v1116 = vunpack.c.0.s8 %v1115
        %v1117 = vlaneseq
        %v1118 = vshrl.u32 %v1117, 7
        %v1119 = vsub.s32 %v1116, %v1118
        %v1120 = vrot.slane %v1082, %v1119
        %v1122 = vunpack.c.l.s4 1983009808
        %v1123 = vunpack.c.0.s8 %v1122
        %v1124 = vlaneseq
        %v1125 = vshrl.u32 %v1124, 7
        %v1126 = vsub.s32 %v1123, %v1125
        %v1127 = vrot.slane %v1113, %v1126
        %v1128 = vcombine.high %v1120, %v1120
        %1129 = vrot.lane.b32.xlu0 %v1120, 95
        %v1130 = vpop.permute.xlu0 %1129
        %1131 = vrot.lane.b32.xlu0 %v1128, 95
        %v1132 = vpop.permute.xlu0 %1131
        %1133 = vrot.lane.b32.xlu0 %v1127, 95
        %v1134 = vpop.permute.xlu0 %1133
        %vm1135 = vcmask 777216
        %v1136 = vsel %vm1135, %v1130, %v1132
        %v1137 = vsel %vm1135, %v1132, %v1134
        %v1139 = vsel %vm443, %v1110, 0
        %v1142 = vsel %vm443, %v1111, 0
        %v1145 = vsel %vm450, %v1136, 0
        %v1148 = vsel %vm450, %v1137, 0
        %1150 = vmatprep.subr.bf16.mxu0 0
        %1151 = vmatpush1.bf16.msra.mxu0 0
        %1152 = vmatprep.subr.bf16.mxu0 0
        %1153 = vmatpush1.bf16.msra.mxu0 0
        %1154 = vmatprep.subr.bf16.mxu0 0
        %1155 = vmatpush1.bf16.msra.mxu0 0
        %1156 = vmatprep.subr.bf16.mxu0 0
        %1157 = vmatpush1.bf16.msra.mxu0 0
        %1158 = vmatprep.subr.bf16.mxu0 0
        %1159 = vmatpush1.bf16.msra.mxu0 0
        %1160 = vmatprep.subr.bf16.mxu0 0
        %1161 = vmatpush1.bf16.msra.mxu0 0
        %1162 = vmatprep.subr.bf16.mxu0 0
        %1163 = vmatpush1.bf16.msra.mxu0 0
        %1164 = vmatprep.subr.bf16.mxu0 %v1148
        %1165 = vmatpush1.bf16.msra.mxu0 %v1145
        %1166 = vmatprep.subr.bf16.mxu0 0
        %1167 = vmatpush2.bf16.msra.mxu0 0
        %1168 = vmatprep.subr.bf16.mxu0 0
        %1169 = vmatpush2.bf16.msra.mxu0 0
        %1170 = vmatprep.subr.bf16.mxu0 0
        %1171 = vmatpush2.bf16.msra.mxu0 0
        %1172 = vmatprep.subr.bf16.mxu0 0
        %1173 = vmatpush2.bf16.msra.mxu0 0
        %1174 = vmatprep.subr.bf16.mxu0 0
        %1175 = vmatpush2.bf16.msra.mxu0 0
        %1176 = vmatprep.subr.bf16.mxu0 0
        %1177 = vmatpush2.bf16.msra.mxu0 0
        %1178 = vmatprep.subr.bf16.mxu0 0
        %1179 = vmatpush2.bf16.msra.mxu0 0
        %1180 = vmatprep.subr.bf16.mxu0 0
        %1181 = vmatpush2.bf16.msra.mxu0 0
        %1182 = vmatprep.mubr.bf16.mxu0 0
        %1183 = vmatmul.mubr.bf16.gmra.mxu0 %v1139
        %v1184 = vpop.f32.mrf.mxu0
        %v1185 = vadd.f32 0.0, %v1184
        %v1186 = vpop.f32.mrf.mxu0
        %v1187 = vadd.f32 0.0, %v1186
        %v1188 = vpop.f32.mrf.mxu0
        %v1189 = vadd.f32 0.0, %v1188
        %v1190 = vpop.f32.mrf.mxu0
        %v1191 = vadd.f32 0.0, %v1190
        %1192 = vmatprep.mubr.bf16.mxu0 0
        %1193 = vmatmul.mubr.bf16.gmra.mxu0 %v1142
        %v1194 = vpop.f32.mrf.mxu0
        %v1195 = vadd.f32 0.0, %v1194
        %v1196 = vpop.f32.mrf.mxu0
        %v1197 = vadd.f32 0.0, %v1196
        %v1198 = vpop.f32.mrf.mxu0
        %v1199 = vadd.f32 0.0, %v1198
        %v1200 = vpop.f32.mrf.mxu0
        %v1201 = vadd.f32 0.0, %v1200
        %1202 = vdwg.mxu0
        %v1203 = vadd.f32 %v1074, %v1185
        %v1204 = vadd.f32 %v1075, %v1187
        %v1205 = vadd.f32 %v1076, %v1189
        %v1206 = vadd.f32 %v1077, %v1191
        %v1207 = vadd.f32 %v1078, %v1195
        %v1208 = vadd.f32 %v1079, %v1197
        %v1209 = vadd.f32 %v1080, %v1199
        %v1210 = vadd.f32 %v1081, %v1201
        %s1211 = scalar_lea.vmem %s316, 96
        %v1212 = vld [vmem:[%s1211] sm:$0xf]
        %v1213 = vld [vmem:[%s1211 + $0x4] sm:$0xf]
        %v1214 = vld [vmem:[%s1211 + $0x8] sm:$0xf]
        %v1215 = vld [vmem:[%s1211 + $0xc] sm:$0xf]
        %v1220 = vunpack.c.l.b16 %v1212
        %v1221 = vunpack.c.l.b16 %v1213
        %v1222 = vunpack.c.l.b16 %v1214
        %v1223 = vunpack.c.l.b16 %v1215
        %v1224 = vpack.c.b16 %v1221, %v1220
        %v1225 = vpack.c.b16 %v1223, %v1222
        %v1227 = vcombine.high %v1089, %v1089
        %v1229 = vunpack.c.l.s4 1983009808
        %v1230 = vunpack.c.0.s8 %v1229
        %v1231 = vlaneseq
        %v1232 = vshrl.u32 %v1231, 7
        %v1233 = vsub.s32 %v1230, %v1232
        %v1234 = vrot.slane %v1089, %v1233
        %v1236 = vunpack.c.l.s4 1983009808
        %v1237 = vunpack.c.0.s8 %v1236
        %v1238 = vlaneseq
        %v1239 = vshrl.u32 %v1238, 7
        %v1240 = vsub.s32 %v1237, %v1239
        %v1241 = vrot.slane %v1227, %v1240
        %v1242 = vcombine.high %v1234, %v1234
        %1243 = vrot.lane.b32.xlu0 %v1234, 96
        %v1244 = vpop.permute.xlu0 %1243
        %1245 = vrot.lane.b32.xlu0 %v1242, 96
        %v1246 = vpop.permute.xlu0 %1245
        %1247 = vrot.lane.b32.xlu0 %v1241, 96
        %v1248 = vpop.permute.xlu0 %1247
        %vm1249 = vcmask 785408
        %v1250 = vsel %vm1249, %v1244, %v1246
        %v1251 = vsel %vm1249, %v1246, %v1248
        %v1253 = vsel %vm443, %v1224, 0
        %v1256 = vsel %vm443, %v1225, 0
        %v1259 = vsel %vm450, %v1250, 0
        %v1262 = vsel %vm450, %v1251, 0
        %1264 = vmatprep.subr.bf16.mxu0 0
        %1265 = vmatpush1.bf16.msra.mxu0 0
        %1266 = vmatprep.subr.bf16.mxu0 0
        %1267 = vmatpush1.bf16.msra.mxu0 0
        %1268 = vmatprep.subr.bf16.mxu0 0
        %1269 = vmatpush1.bf16.msra.mxu0 0
        %1270 = vmatprep.subr.bf16.mxu0 0
        %1271 = vmatpush1.bf16.msra.mxu0 0
        %1272 = vmatprep.subr.bf16.mxu0 0
        %1273 = vmatpush1.bf16.msra.mxu0 0
        %1274 = vmatprep.subr.bf16.mxu0 0
        %1275 = vmatpush1.bf16.msra.mxu0 0
        %1276 = vmatprep.subr.bf16.mxu0 0
        %1277 = vmatpush1.bf16.msra.mxu0 0
        %1278 = vmatprep.subr.bf16.mxu0 %v1262
        %1279 = vmatpush1.bf16.msra.mxu0 %v1259
        %1280 = vmatprep.subr.bf16.mxu0 0
        %1281 = vmatpush2.bf16.msra.mxu0 0
        %1282 = vmatprep.subr.bf16.mxu0 0
        %1283 = vmatpush2.bf16.msra.mxu0 0
        %1284 = vmatprep.subr.bf16.mxu0 0
        %1285 = vmatpush2.bf16.msra.mxu0 0
        %1286 = vmatprep.subr.bf16.mxu0 0
        %1287 = vmatpush2.bf16.msra.mxu0 0
        %1288 = vmatprep.subr.bf16.mxu0 0
        %1289 = vmatpush2.bf16.msra.mxu0 0
        %1290 = vmatprep.subr.bf16.mxu0 0
        %1291 = vmatpush2.bf16.msra.mxu0 0
        %1292 = vmatprep.subr.bf16.mxu0 0
        %1293 = vmatpush2.bf16.msra.mxu0 0
        %1294 = vmatprep.subr.bf16.mxu0 0
        %1295 = vmatpush2.bf16.msra.mxu0 0
        %1296 = vmatprep.mubr.bf16.mxu0 0
        %1297 = vmatmul.mubr.bf16.gmra.mxu0 %v1253
        %v1298 = vpop.f32.mrf.mxu0
        %v1299 = vadd.f32 0.0, %v1298
        %v1300 = vpop.f32.mrf.mxu0
        %v1301 = vadd.f32 0.0, %v1300
        %v1302 = vpop.f32.mrf.mxu0
        %v1303 = vadd.f32 0.0, %v1302
        %v1304 = vpop.f32.mrf.mxu0
        %v1305 = vadd.f32 0.0, %v1304
        %1306 = vmatprep.mubr.bf16.mxu0 0
        %1307 = vmatmul.mubr.bf16.gmra.mxu0 %v1256
        %v1308 = vpop.f32.mrf.mxu0
        %v1309 = vadd.f32 0.0, %v1308
        %v1310 = vpop.f32.mrf.mxu0
        %v1311 = vadd.f32 0.0, %v1310
        %v1312 = vpop.f32.mrf.mxu0
        %v1313 = vadd.f32 0.0, %v1312
        %v1314 = vpop.f32.mrf.mxu0
        %v1315 = vadd.f32 0.0, %v1314
        %1316 = vdwg.mxu0
        %v1317 = vadd.f32 %v1203, %v1299
        %v1318 = vadd.f32 %v1204, %v1301
        %v1319 = vadd.f32 %v1205, %v1303
        %v1320 = vadd.f32 %v1206, %v1305
        %v1321 = vadd.f32 %v1207, %v1309
        %v1322 = vadd.f32 %v1208, %v1311
        %v1323 = vadd.f32 %v1209, %v1313
        %v1324 = vadd.f32 %v1210, %v1315
        %s1325 = scalar_lea.vmem %s316, 128
        %v1326 = vld [vmem:[%s1325] sm:$0xf]
        %v1327 = vld [vmem:[%s1325 + $0x4] sm:$0xf]
        %v1328 = vld [vmem:[%s1325 + $0x8] sm:$0xf]
        %v1329 = vld [vmem:[%s1325 + $0xc] sm:$0xf]
        %v1334 = vunpack.c.l.b16 %v1326
        %v1335 = vunpack.c.l.b16 %v1327
        %v1336 = vunpack.c.l.b16 %v1328
        %v1337 = vunpack.c.l.b16 %v1329
        %v1338 = vpack.c.b16 %v1335, %v1334
        %v1339 = vpack.c.b16 %v1337, %v1336
        %v1341 = vcombine.high %v1096, %v1096
        %v1343 = vunpack.c.l.s4 1983009808
        %v1344 = vunpack.c.0.s8 %v1343
        %v1345 = vlaneseq
        %v1346 = vshrl.u32 %v1345, 7
        %v1347 = vsub.s32 %v1344, %v1346
        %v1348 = vrot.slane %v1096, %v1347
        %v1350 = vunpack.c.l.s4 1983009808
        %v1351 = vunpack.c.0.s8 %v1350
        %v1352 = vlaneseq
        %v1353 = vshrl.u32 %v1352, 7
        %v1354 = vsub.s32 %v1351, %v1353
        %v1355 = vrot.slane %v1341, %v1354
        %v1356 = vcombine.high %v1348, %v1348
        %1357 = vrot.lane.b32.xlu0 %v1348, 94
        %v1358 = vpop.permute.xlu0 %1357
        %1359 = vrot.lane.b32.xlu0 %v1356, 94
        %v1360 = vpop.permute.xlu0 %1359
        %1361 = vrot.lane.b32.xlu0 %v1355, 94
        %v1362 = vpop.permute.xlu0 %1361
        %vm1363 = vcmask 769024
        %v1364 = vsel %vm1363, %v1358, %v1360
        %v1365 = vsel %vm1363, %v1360, %v1362
        %v1367 = vsel %vm443, %v1338, 0
        %v1370 = vsel %vm443, %v1339, 0
        %v1373 = vsel %vm450, %v1364, 0
        %v1376 = vsel %vm450, %v1365, 0
        %1378 = vmatprep.subr.bf16.mxu0 0
        %1379 = vmatpush1.bf16.msra.mxu0 0
        %1380 = vmatprep.subr.bf16.mxu0 0
        %1381 = vmatpush1.bf16.msra.mxu0 0
        %1382 = vmatprep.subr.bf16.mxu0 0
        %1383 = vmatpush1.bf16.msra.mxu0 0
        %1384 = vmatprep.subr.bf16.mxu0 0
        %1385 = vmatpush1.bf16.msra.mxu0 0
        %1386 = vmatprep.subr.bf16.mxu0 0
        %1387 = vmatpush1.bf16.msra.mxu0 0
        %1388 = vmatprep.subr.bf16.mxu0 0
        %1389 = vmatpush1.bf16.msra.mxu0 0
        %1390 = vmatprep.subr.bf16.mxu0 0
        %1391 = vmatpush1.bf16.msra.mxu0 0
        %1392 = vmatprep.subr.bf16.mxu0 %v1376
        %1393 = vmatpush1.bf16.msra.mxu0 %v1373
        %1394 = vmatprep.subr.bf16.mxu0 0
        %1395 = vmatpush2.bf16.msra.mxu0 0
        %1396 = vmatprep.subr.bf16.mxu0 0
        %1397 = vmatpush2.bf16.msra.mxu0 0
        %1398 = vmatprep.subr.bf16.mxu0 0
        %1399 = vmatpush2.bf16.msra.mxu0 0
        %1400 = vmatprep.subr.bf16.mxu0 0
        %1401 = vmatpush2.bf16.msra.mxu0 0
        %1402 = vmatprep.subr.bf16.mxu0 0
        %1403 = vmatpush2.bf16.msra.mxu0 0
        %1404 = vmatprep.subr.bf16.mxu0 0
        %1405 = vmatpush2.bf16.msra.mxu0 0
        %1406 = vmatprep.subr.bf16.mxu0 0
        %1407 = vmatpush2.bf16.msra.mxu0 0
        %1408 = vmatprep.subr.bf16.mxu0 0
        %1409 = vmatpush2.bf16.msra.mxu0 0
        %1410 = vmatprep.mubr.bf16.mxu0 0
        %1411 = vmatmul.mubr.bf16.gmra.mxu0 %v1367
        %v1412 = vpop.f32.mrf.mxu0
        %v1413 = vadd.f32 0.0, %v1412
        %v1414 = vpop.f32.mrf.mxu0
        %v1415 = vadd.f32 0.0, %v1414
        %v1416 = vpop.f32.mrf.mxu0
        %v1417 = vadd.f32 0.0, %v1416
        %v1418 = vpop.f32.mrf.mxu0
        %v1419 = vadd.f32 0.0, %v1418
        %1420 = vmatprep.mubr.bf16.mxu0 0
        %1421 = vmatmul.mubr.bf16.gmra.mxu0 %v1370
        %v1422 = vpop.f32.mrf.mxu0
        %v1423 = vadd.f32 0.0, %v1422
        %v1424 = vpop.f32.mrf.mxu0
        %v1425 = vadd.f32 0.0, %v1424
        %v1426 = vpop.f32.mrf.mxu0
        %v1427 = vadd.f32 0.0, %v1426
        %v1428 = vpop.f32.mrf.mxu0
        %v1429 = vadd.f32 0.0, %v1428
        %1430 = vdwg.mxu0
        %v1431 = vadd.f32 %v1317, %v1413
        %v1432 = vadd.f32 %v1318, %v1415
        %v1433 = vadd.f32 %v1319, %v1417
        %v1434 = vadd.f32 %v1320, %v1419
        %v1435 = vadd.f32 %v1321, %v1423
        %v1436 = vadd.f32 %v1322, %v1425
        %v1437 = vadd.f32 %v1323, %v1427
        %v1438 = vadd.f32 %v1324, %v1429
        %v1439 = vadd.f32 %v1431, %v1432
        %1440 = vadd.xlane.f32.xlu0 %v1439
        %v1441 = vpop.xlane.xlu0 %1440
        %v1442 = vadd.f32 %v1433, %v1434
        %1443 = vadd.xlane.f32.xlu0 %v1442
        %v1444 = vpop.xlane.xlu0 %1443
        %v1445 = vadd.f32 %v1435, %v1436
        %1446 = vadd.xlane.f32.xlu0 %v1445
        %v1447 = vpop.xlane.xlu0 %1446
        %v1448 = vadd.f32 %v1437, %v1438
        %1449 = vadd.xlane.f32.xlu0 %v1448
        %v1450 = vpop.xlane.xlu0 %1449
        %v1451 = vld [vmem:[%s4] sm:$0xff]
        %v1452 = vld [vmem:[%s4 + $0x8] sm:$0xff]
        %v1453 = vld [vmem:[%s4 + $0x10] sm:$0xff]
        %v1454 = vld [vmem:[%s4 + $0x18] sm:$0xff]
        %vm1455 = vcmask 261120
        %v1457 = vsel %vm1455, %v1451, 0
        %v1460 = vsel %vm1455, %v1452, 0
        %v1463 = vsel %vm1455, %v1453, 0
        %v1466 = vsel %vm1455, %v1454, 0
        %1468 = vmatprep.subr.mxu0 0.0
        %1469 = vmatpush1.msra.mxu0 0.0
        %1470 = vmatprep.subr.mxu0 0.0
        %1471 = vmatpush1.msra.mxu0 0.0
        %1472 = vmatprep.subr.mxu0 0.0
        %1473 = vmatpush1.msra.mxu0 0.0
        %1474 = vmatprep.subr.mxu0 0.0
        %1475 = vmatpush1.msra.mxu0 0.0
        %1476 = vmatprep.subr.mxu0 0.0
        %1477 = vmatpush1.msra.mxu0 0.0
        %1478 = vmatprep.subr.mxu0 0.0
        %1479 = vmatpush1.msra.mxu0 0.0
        %1480 = vmatprep.subr.mxu0 0.0
        %1481 = vmatpush1.msra.mxu0 0.0
        %1482 = vmatprep.subr.mxu0 0.0
        %1483 = vmatpush1.msra.mxu0 0.0
        %1484 = vmatprep.subr.mxu0 0.0
        %1485 = vmatpush1.msra.mxu0 0.0
        %1486 = vmatprep.subr.mxu0 0.0
        %1487 = vmatpush1.msra.mxu0 0.0
        %1488 = vmatprep.subr.mxu0 0.0
        %1489 = vmatpush1.msra.mxu0 0.0
        %1490 = vmatprep.subr.mxu0 0.0
        %1491 = vmatpush1.msra.mxu0 0.0
        %1492 = vmatprep.subr.mxu0 0.0
        %1493 = vmatpush1.msra.mxu0 %v1450
        %1494 = vmatprep.subr.mxu0 0.0
        %1495 = vmatpush1.msra.mxu0 %v1447
        %1496 = vmatprep.subr.mxu0 0.0
        %1497 = vmatpush1.msra.mxu0 %v1444
        %1498 = vmatprep.subr.mxu0 0.0
        %1499 = vmatpush1.msra.mxu0 %v1441
        %1500 = vmatprep.subr.mxu0 0.0
        %1501 = vmatpush2.msra.mxu0 0.0
        %1502 = vmatprep.subr.mxu0 0.0
        %1503 = vmatpush2.msra.mxu0 0.0
        %1504 = vmatprep.subr.mxu0 0.0
        %1505 = vmatpush2.msra.mxu0 0.0
        %1506 = vmatprep.subr.mxu0 0.0
        %1507 = vmatpush2.msra.mxu0 0.0
        %1508 = vmatprep.subr.mxu0 0.0
        %1509 = vmatpush2.msra.mxu0 0.0
        %1510 = vmatprep.subr.mxu0 0.0
        %1511 = vmatpush2.msra.mxu0 0.0
        %1512 = vmatprep.subr.mxu0 0.0
        %1513 = vmatpush2.msra.mxu0 0.0
        %1514 = vmatprep.subr.mxu0 0.0
        %1515 = vmatpush2.msra.mxu0 0.0
        %1516 = vmatprep.subr.mxu0 0.0
        %1517 = vmatpush2.msra.mxu0 0.0
        %1518 = vmatprep.subr.mxu0 0.0
        %1519 = vmatpush2.msra.mxu0 0.0
        %1520 = vmatprep.subr.mxu0 0.0
        %1521 = vmatpush2.msra.mxu0 0.0
        %1522 = vmatprep.subr.mxu0 0.0
        %1523 = vmatpush2.msra.mxu0 0.0
        %1524 = vmatprep.subr.mxu0 0.0
        %1525 = vmatpush2.msra.mxu0 0.0
        %1526 = vmatprep.subr.mxu0 0.0
        %1527 = vmatpush2.msra.mxu0 0.0
        %1528 = vmatprep.subr.mxu0 0.0
        %1529 = vmatpush2.msra.mxu0 0.0
        %1530 = vmatprep.subr.mxu0 0.0
        %1531 = vmatpush2.msra.mxu0 0.0
        %1532 = vmatprep.mubr.f32.mxu0 0.0
        %1533 = vmatmul.mubr.f32.gmra.mxu0 %v1457
        %v1534 = vpop.f32.mrf.mxu0
        %v1535 = vadd.f32 0.0, %v1534
        %v1536 = vpop.f32.mrf.mxu0
        %1537 = vmatprep.mubr.f32.mxu0 0.0
        %1538 = vmatmul.mubr.f32.gmra.mxu0 %v1460
        %v1539 = vpop.f32.mrf.mxu0
        %v1540 = vadd.f32 0.0, %v1539
        %v1541 = vpop.f32.mrf.mxu0
        %1542 = vmatprep.mubr.f32.mxu0 0.0
        %1543 = vmatmul.mubr.f32.gmra.mxu0 %v1463
        %v1544 = vpop.f32.mrf.mxu0
        %v1545 = vadd.f32 0.0, %v1544
        %v1546 = vpop.f32.mrf.mxu0
        %1547 = vmatprep.mubr.f32.mxu0 0.0
        %1548 = vmatmul.mubr.f32.gmra.mxu0 %v1466
        %v1549 = vpop.f32.mrf.mxu0
        %v1550 = vadd.f32 0.0, %v1549
        %v1551 = vpop.f32.mrf.mxu0
        %1552 = vdwg.mxu0
        %v1553 = vmul.f32 %v1535, 0.00390625
        %v1554 = vmul.f32 %v1540, 0.00390625
        %v1555 = vmul.f32 %v1545, 0.00390625
        %v1556 = vmul.f32 %v1550, 0.00390625
        %1558 = vset.pattern.permute.xlu0 0
        %1559 = vperm.xlu0 %1558, %v1553
        %v1560 = vpop.permute.xlu0 %1559
        %1563 = vset.pattern.permute.xlu0 0
        %1564 = vperm.xlu0 %1563, %v1554
        %v1565 = vpop.permute.xlu0 %1564
        %1568 = vset.pattern.permute.xlu0 0
        %1569 = vperm.xlu0 %1568, %v1555
        %v1570 = vpop.permute.xlu0 %1569
        %1573 = vset.pattern.permute.xlu0 0
        %1574 = vperm.xlu0 %1573, %v1556
        %v1575 = vpop.permute.xlu0 %1574
        %v1577 = vsub.f32 %v1431, %v1560
        %v1578 = vsub.f32 %v1432, %v1560
        %v1579 = vsub.f32 %v1433, %v1565
        %v1580 = vsub.f32 %v1434, %v1565
        %v1581 = vsub.f32 %v1435, %v1570
        %v1582 = vsub.f32 %v1436, %v1570
        %v1583 = vsub.f32 %v1437, %v1575
        %v1584 = vsub.f32 %v1438, %v1575
        %v1585 = vmul.f32 %v1577, %v1577
        %v1586 = vmul.f32 %v1578, %v1578
        %v1587 = vmul.f32 %v1579, %v1579
        %v1588 = vmul.f32 %v1580, %v1580
        %v1589 = vmul.f32 %v1581, %v1581
        %v1590 = vmul.f32 %v1582, %v1582
        %v1591 = vmul.f32 %v1583, %v1583
        %v1592 = vmul.f32 %v1584, %v1584
        %v1593 = vadd.f32 %v1585, %v1586
        %1594 = vadd.xlane.f32.xlu0 %v1593
        %v1595 = vpop.xlane.xlu0 %1594
        %v1596 = vadd.f32 %v1587, %v1588
        %1597 = vadd.xlane.f32.xlu0 %v1596
        %v1598 = vpop.xlane.xlu0 %1597
        %v1599 = vadd.f32 %v1589, %v1590
        %1600 = vadd.xlane.f32.xlu0 %v1599
        %v1601 = vpop.xlane.xlu0 %1600
        %v1602 = vadd.f32 %v1591, %v1592
        %1603 = vadd.xlane.f32.xlu0 %v1602
        %v1604 = vpop.xlane.xlu0 %1603
        %1605 = vmatprep.subr.mxu0 0.0
        %1606 = vmatpush1.msra.mxu0 0.0
        %1607 = vmatprep.subr.mxu0 0.0
        %1608 = vmatpush1.msra.mxu0 0.0
        %1609 = vmatprep.subr.mxu0 0.0
        %1610 = vmatpush1.msra.mxu0 0.0
        %1611 = vmatprep.subr.mxu0 0.0
        %1612 = vmatpush1.msra.mxu0 0.0
        %1613 = vmatprep.subr.mxu0 0.0
        %1614 = vmatpush1.msra.mxu0 0.0
        %1615 = vmatprep.subr.mxu0 0.0
        %1616 = vmatpush1.msra.mxu0 0.0
        %1617 = vmatprep.subr.mxu0 0.0
        %1618 = vmatpush1.msra.mxu0 0.0
        %1619 = vmatprep.subr.mxu0 0.0
        %1620 = vmatpush1.msra.mxu0 0.0
        %1621 = vmatprep.subr.mxu0 0.0
        %1622 = vmatpush1.msra.mxu0 0.0
        %1623 = vmatprep.subr.mxu0 0.0
        %1624 = vmatpush1.msra.mxu0 0.0
        %1625 = vmatprep.subr.mxu0 0.0
        %1626 = vmatpush1.msra.mxu0 0.0
        %1627 = vmatprep.subr.mxu0 0.0
        %1628 = vmatpush1.msra.mxu0 0.0
        %1629 = vmatprep.subr.mxu0 0.0
        %1630 = vmatpush1.msra.mxu0 %v1604
        %1631 = vmatprep.subr.mxu0 0.0
        %1632 = vmatpush1.msra.mxu0 %v1601
        %1633 = vmatprep.subr.mxu0 0.0
        %1634 = vmatpush1.msra.mxu0 %v1598
        %1635 = vmatprep.subr.mxu0 0.0
        %1636 = vmatpush1.msra.mxu0 %v1595
        %1637 = vmatprep.subr.mxu0 0.0
        %1638 = vmatpush2.msra.mxu0 0.0
        %1639 = vmatprep.subr.mxu0 0.0
        %1640 = vmatpush2.msra.mxu0 0.0
        %1641 = vmatprep.subr.mxu0 0.0
        %1642 = vmatpush2.msra.mxu0 0.0
        %1643 = vmatprep.subr.mxu0 0.0
        %1644 = vmatpush2.msra.mxu0 0.0
        %1645 = vmatprep.subr.mxu0 0.0
        %1646 = vmatpush2.msra.mxu0 0.0
        %1647 = vmatprep.subr.mxu0 0.0
        %1648 = vmatpush2.msra.mxu0 0.0
        %1649 = vmatprep.subr.mxu0 0.0
        %1650 = vmatpush2.msra.mxu0 0.0
        %1651 = vmatprep.subr.mxu0 0.0
        %1652 = vmatpush2.msra.mxu0 0.0
        %1653 = vmatprep.subr.mxu0 0.0
        %1654 = vmatpush2.msra.mxu0 0.0
        %1655 = vmatprep.subr.mxu0 0.0
        %1656 = vmatpush2.msra.mxu0 0.0
        %1657 = vmatprep.subr.mxu0 0.0
        %1658 = vmatpush2.msra.mxu0 0.0
        %1659 = vmatprep.subr.mxu0 0.0
        %1660 = vmatpush2.msra.mxu0 0.0
        %1661 = vmatprep.subr.mxu0 0.0
        %1662 = vmatpush2.msra.mxu0 0.0
        %1663 = vmatprep.subr.mxu0 0.0
        %1664 = vmatpush2.msra.mxu0 0.0
        %1665 = vmatprep.subr.mxu0 0.0
        %1666 = vmatpush2.msra.mxu0 0.0
        %1667 = vmatprep.subr.mxu0 0.0
        %1668 = vmatpush2.msra.mxu0 0.0
        %1669 = vmatprep.mubr.f32.mxu0 0.0
        %1670 = vmatmul.mubr.f32.gmra.mxu0 %v1457
        %v1671 = vpop.f32.mrf.mxu0
        %v1672 = vadd.f32 0.0, %v1671
        %v1673 = vpop.f32.mrf.mxu0
        %1674 = vmatprep.mubr.f32.mxu0 0.0
        %1675 = vmatmul.mubr.f32.gmra.mxu0 %v1460
        %v1676 = vpop.f32.mrf.mxu0
        %v1677 = vadd.f32 0.0, %v1676
        %v1678 = vpop.f32.mrf.mxu0
        %1679 = vmatprep.mubr.f32.mxu0 0.0
        %1680 = vmatmul.mubr.f32.gmra.mxu0 %v1463
        %v1681 = vpop.f32.mrf.mxu0
        %v1682 = vadd.f32 0.0, %v1681
        %v1683 = vpop.f32.mrf.mxu0
        %1684 = vmatprep.mubr.f32.mxu0 0.0
        %1685 = vmatmul.mubr.f32.gmra.mxu0 %v1466
        %v1686 = vpop.f32.mrf.mxu0
        %v1687 = vadd.f32 0.0, %v1686
        %v1688 = vpop.f32.mrf.mxu0
        %1689 = vdwg.mxu0
        %v1690 = vmul.f32 %v1672, 0.00390625
        %v1691 = vmul.f32 %v1677, 0.00390625
        %v1692 = vmul.f32 %v1682, 0.00390625
        %v1693 = vmul.f32 %v1687, 0.00390625
        %v1694 = vadd.f32 %v1690, 1e-05
        %v1695 = vadd.f32 %v1691, 1e-05
        %v1696 = vadd.f32 %v1692, 1e-05
        %v1697 = vadd.f32 %v1693, 1e-05
        %v1698 = vrsqrt.pop %v1694
        %v1699 = vrsqrt.pop %v1695
        %v1700 = vrsqrt.pop %v1696
        %v1701 = vrsqrt.pop %v1697
        %1703 = vset.pattern.permute.xlu0 0
        %1704 = vperm.xlu0 %1703, %v1698
        %v1705 = vpop.permute.xlu0 %1704
        %1708 = vset.pattern.permute.xlu0 0
        %1709 = vperm.xlu0 %1708, %v1699
        %v1710 = vpop.permute.xlu0 %1709
        %1713 = vset.pattern.permute.xlu0 0
        %1714 = vperm.xlu0 %1713, %v1700
        %v1715 = vpop.permute.xlu0 %1714
        %1718 = vset.pattern.permute.xlu0 0
        %1719 = vperm.xlu0 %1718, %v1701
        %v1720 = vpop.permute.xlu0 %1719
        %v1722 = vmul.f32 %v1577, %v1705
        %v1723 = vmul.f32 %v1578, %v1705
        %v1724 = vmul.f32 %v1579, %v1710
        %v1725 = vmul.f32 %v1580, %v1710
        %v1726 = vmul.f32 %v1581, %v1715
        %v1727 = vmul.f32 %v1582, %v1715
        %v1728 = vmul.f32 %v1583, %v1720
        %v1729 = vmul.f32 %v1584, %v1720
        %v1730 = vld [vmem:[%s322] sm:$0xff]
        %v1731 = vld [vmem:[%s322 + $0x8] sm:$0xff]
        %v1732 = vld [vmem:[%s322 + $0x10] sm:$0xff]
        %v1733 = vld [vmem:[%s322 + $0x18] sm:$0xff]
        %1735 = vset.pattern.permute.xlu0 0
        %1736 = vperm.xlu0 %1735, %v1730
        %v1737 = vpop.permute.xlu0 %1736
        %1740 = vset.pattern.permute.xlu0 0
        %1741 = vperm.xlu0 %1740, %v1731
        %v1742 = vpop.permute.xlu0 %1741
        %1745 = vset.pattern.permute.xlu0 0
        %1746 = vperm.xlu0 %1745, %v1732
        %v1747 = vpop.permute.xlu0 %1746
        %1750 = vset.pattern.permute.xlu0 0
        %1751 = vperm.xlu0 %1750, %v1733
        %v1752 = vpop.permute.xlu0 %1751
        %v1754 = vmul.f32 %v1722, %v1737
        %v1755 = vmul.f32 %v1723, %v1737
        %v1756 = vmul.f32 %v1724, %v1742
        %v1757 = vmul.f32 %v1725, %v1742
        %v1758 = vmul.f32 %v1726, %v1747
        %v1759 = vmul.f32 %v1727, %v1747
        %v1760 = vmul.f32 %v1728, %v1752
        %v1761 = vmul.f32 %v1729, %v1752
        %v1762 = vld [vmem:[%s328] sm:$0xff]
        %v1763 = vld [vmem:[%s328 + $0x8] sm:$0xff]
        %v1764 = vld [vmem:[%s328 + $0x10] sm:$0xff]
        %v1765 = vld [vmem:[%s328 + $0x18] sm:$0xff]
        %1767 = vset.pattern.permute.xlu0 0
        %1768 = vperm.xlu0 %1767, %v1762
        %v1769 = vpop.permute.xlu0 %1768
        %1772 = vset.pattern.permute.xlu0 0
        %1773 = vperm.xlu0 %1772, %v1763
        %v1774 = vpop.permute.xlu0 %1773
        %1777 = vset.pattern.permute.xlu0 0
        %1778 = vperm.xlu0 %1777, %v1764
        %v1779 = vpop.permute.xlu0 %1778
        %1782 = vset.pattern.permute.xlu0 0
        %1783 = vperm.xlu0 %1782, %v1765
        %v1784 = vpop.permute.xlu0 %1783
        %v1786 = vadd.f32 %v1754, %v1769
        %v1787 = vadd.f32 %v1755, %v1769
        %v1788 = vadd.f32 %v1756, %v1774
        %v1789 = vadd.f32 %v1757, %v1774
        %v1790 = vadd.f32 %v1758, %v1779
        %v1791 = vadd.f32 %v1759, %v1779
        %v1792 = vadd.f32 %v1760, %v1784
        %v1793 = vadd.f32 %v1761, %v1784
        %v1794 = vmax.f32 %v1786, 0.0
        %v1795 = vmax.f32 %v1787, 0.0
        %v1796 = vmax.f32 %v1788, 0.0
        %v1797 = vmax.f32 %v1789, 0.0
        %v1798 = vmax.f32 %v1790, 0.0
        %v1799 = vmax.f32 %v1791, 0.0
        %v1800 = vmax.f32 %v1792, 0.0
        %v1801 = vmax.f32 %v1793, 0.0
        %1802 = vst [vmem:[%s306] sm:$0xff] %v1794
        %1803 = vst [vmem:[%s306 + $0x8] sm:$0xff] %v1795
        %1804 = vst [vmem:[%s306 + $0x10] sm:$0xff] %v1796
        %1805 = vst [vmem:[%s306 + $0x18] sm:$0xff] %v1797
        %1806 = vst [vmem:[%s306 + $0x20] sm:$0xff] %v1798
        %1807 = vst [vmem:[%s306 + $0x28] sm:$0xff] %v1799
        %1808 = vst [vmem:[%s306 + $0x30] sm:$0xff] %v1800
        %1809 = vst [vmem:[%s306 + $0x38] sm:$0xff] %v1801
        %s1810 = sand.u32 %s188, 1
        %s1811 = scalar_lea.sflag [#allocation3], %s1810
        %s1812 = sand.u32 %s188, 1
        %s1813 = smul.addr %s1812, 64
        %s1814 = scalar_lea.vmem [#allocation2], %s1813
        // Predicated region
        $region45: #{tpu_custom_call.1} parent=43 // pred_check
          %p1815 = pneg %p198
        $region46: #{tpu_custom_call.1} parent=43 // pred_check_branch
          %1817 = sbr.rel (%p1815) target = $region48
        $region47: #{tpu_custom_call.1} parent=43 // pred_region
          %s1818 = smul.u32 4, %s25
          %s1820 = ssub.s32 1024, 1024
          %1821 = vsyncadd %s1811, %s1820
          %s1822 = smul.addr %s1818, 2
          %s1823 = smul.addr %s24, 8
          %s1824 = sadd.s32 %s1822, %s1823
          %s1825 = smul.addr %s1824, 128
          %s1826 = scalar_lea.hbm %s6, %s1825
          %s1827 = sshll.u32 %s1814, 4
          %s1828 = int_to_ptr.vmem [resolvable:$true] %s1827
          %1833 = dma.vmem_to_hbm [thread:$0]  %s1828, 1024, %s1826, %s1811, 256, 256, 16
        $region48: #{tpu_custom_call.1} parent=43 // pred_fallthru
          _
      $region44: #{tpu_custom_call.1} parent=5 // pred_fallthru
        _
      %p1834 = scmp.le.s32.totalorder 2, %s15
      // Predicated region
      $region49: #{tpu_custom_call.1} parent=5 // pred_check
        %p1835 = pneg %p1834
      $region50: #{tpu_custom_call.1} parent=5 // pred_check_branch
        %1837 = sbr.rel (%p1835) target = $region52
      $region51: #{tpu_custom_call.1} parent=5 // pred_region
        %s1838 = ssub.s32 %s15, 2
        // Predicated region
        $region53: #{tpu_custom_call.1} parent=51 // pred_check
          %p1839 = pneg %p204
        $region54: #{tpu_custom_call.1} parent=51 // pred_check_branch
          %1841 = sbr.rel (%p1839) target = $region56
        $region55: #{tpu_custom_call.1} parent=51 // pred_region
          %s1842 = sand.u32 %s189, 1
          %s1843 = scalar_lea.sflag [#allocation3], %s1842
          %s1844 = sand.u32 %s189, 1
          %s1845 = smul.addr %s1844, 64
          %s1846 = scalar_lea.vmem [#allocation2], %s1845
          %1847 = dma.done %s1843, 1024
        $region56: #{tpu_custom_call.1} parent=51 // pred_fallthru
          _
      $region52: #{tpu_custom_call.1} parent=5 // pred_fallthru
        _
    $region6: #{tpu_custom_call.1} parent=1 // loop_footer
      %s19 = sadd.s32 1, %s15
    $region7: #{tpu_custom_call.1} parent=1 // loop_footer_branch
      %14 = sbr.rel target = $region3
    $region8: #{tpu_custom_call.1} parent=1 // loop_exit
      _
    %1848 = vsyncpa [#allocation3], 1
    %s1849 = scalar_lea.sflag [#allocation3], 1
    %1850 = vsyncpa %s1849, 1

</llo_original>
